<compile_context>
chip_gen: v6e
topology: v6e:2x2x1
jax: 0.10.0
libtpu: 0.0.40
codegen_flags: <defaults>
</compile_context>

<pallas_src>
import numpy as np
import jax
import jax.numpy as jnp
from jax.scipy.special import logsumexp
from jax.experimental import pallas as pl
from jax.experimental.pallas import tpu as pltpu

# ----------------------------- model hyper-parameters -----------------------------
H = 64          # config.hidden_size
E = 64          # emb_size
BS = 16         # block_size
NB = E // BS    # number of bilinear blocks
NC = 8          # config.num_labels (relation classes incl. threshold class 0)
NHEADS = 4      # attention heads
C = 128         # sequence length
NDOCS = 2       # batch of documents
TR = 256        # pair tile (grid block along the pair axis); sweep 512/1024 for big docs
LANES = 128     # lane-padded classifier / output width
K_LABELS = 4    # num_labels used by ATLoss.get_label


# --------------------------------- Pallas kernel -----------------------------------
def docre_pair_kernel(doc_ref, hsts_ref, att_ref, p_ref, went_ref, bht_ref,
                      wbd_ref, s2_ref, bb_ref, logits_ref):
    del doc_ref  # tile->doc map is only consumed by the index_maps

    # ---- fused context pooling + extractor pre-activations (two N=128 MXU matmuls) ----
    #   x[:, :E] = [hs|rs] @ W_head^T + b_head     x[:, E:] = [ts|rs] @ W_tail^T + b_tail
    # with rs = att @ seq_doc folded into att @ (seq_doc @ [Whr^T | Wtr^T]).
    x = jnp.dot(att_ref[...], p_ref[0], preferred_element_type=jnp.float32)
    x = x + jnp.dot(hsts_ref[...], went_ref[...],
                    preferred_element_type=jnp.float32)
    x = x + bht_ref[...]                                            # [TR, 2E] f32

    zh = jnp.tanh(jnp.tanh(x[:, :E]))   # double tanh on the head side, as in the module
    zt = jnp.tanh(x[:, E:])             # [TR, E] f32

    # ---- group bilinear + classifier as two dense matmuls ----
    # u[r, o*E + k*BS + i] = sum_j zt[r, k*BS+j] * Wbil[o, k*BS*BS + i*BS + j]
    u = jnp.dot(zt.astype(jnp.bfloat16), wbd_ref[...],
                preferred_element_type=jnp.float32)                 # [TR, NC*E] f32
    # lane-replicate zh across the NC class groups; multiply in bf16 (halves vreg/spill)
    zh16 = zh.astype(jnp.bfloat16)
    prod = jnp.concatenate([zh16] * NC, axis=-1) * u.astype(jnp.bfloat16)  # [TR, NC*E]
    logits_ref[...] = (jnp.dot(prod, s2_ref[...],
                               preferred_element_type=jnp.float32)
                       + bb_ref[...])                               # [TR, LANES] f32


def docre_logits(tile_doc, hsts, att, p_docs, params):
    rp = hsts.shape[0]
    assert rp % TR == 0
    num_tiles = rp // TR
    went, bht, wbd, s2p, bbp = params

    def rep(shape):
        n = len(shape)
        return pl.BlockSpec(shape, lambda i, d, _n=n: (0,) * _n)

    grid_spec = pltpu.PrefetchScalarGridSpec(
        num_scalar_prefetch=1,                                   # tile -> doc id map
        grid=(num_tiles,),
        in_specs=[
            pl.BlockSpec((TR, 2 * H), lambda i, d: (i, 0)),      # [hs|ts] per pair
            pl.BlockSpec((TR, C), lambda i, d: (i, 0)),          # ht attention
            pl.BlockSpec((1, C, 2 * E), lambda i, d: (d[i], 0, 0)),  # per-doc P
            rep((2 * H, 2 * E)),                                 # blockdiag(Whh^T, Wth^T)
            rep((1, 2 * E)),                                     # [b_head | b_tail]
            rep((E, NC * E)),                                    # block-diag bilinear W
            rep((NC * E, LANES)),                                # lane-padded class sum
            rep((1, LANES)),                                     # lane-padded bias
        ],
        out_specs=pl.BlockSpec((TR, LANES), lambda i, d: (i, 0)),
    )
    return pl.pallas_call(
        docre_pair_kernel,
        out_shape=jax.ShapeDtypeStruct((rp, LANES), jnp.float32),
        grid_spec=grid_spec,
        compiler_params=pltpu.CompilerParams(
            dimension_semantics=("parallel",)),
    )(tile_doc, hsts, att, p_docs, went, bht, wbd, s2p, bbp)


# --------------------------------- glue (plain JAX) --------------------------------
def build_pairs(seq_out, attention, entity_pos, hts, offset=1):
    """get_hrt entity pooling (ragged Python structure) -> per-doc pair tensors."""
    _, nh, c, _ = attention.shape
    per_doc = []
    for i in range(len(entity_pos)):
        embs, atts = [], []
        for e in entity_pos[i]:
            if len(e) > 1:
                e_emb, e_att = [], []
                for (start, end) in e:
                    if start + offset < c:
                        e_emb.append(seq_out[i, start + offset])
                        e_att.append(attention[i, :, start + offset])
                if len(e_emb) > 0:
                    e_emb = logsumexp(jnp.stack(e_emb, 0), axis=0)
                    e_att = jnp.stack(e_att, 0).mean(0)
                else:
                    e_emb = jnp.zeros((H,), seq_out.dtype)
                    e_att = jnp.zeros((nh, c), attention.dtype)
            else:
                start, end = e[0]
                if start + offset < c:
                    e_emb = seq_out[i, start + offset]
                    e_att = attention[i, :, start + offset]
                else:
                    e_emb = jnp.zeros((H,), seq_out.dtype)
                    e_att = jnp.zeros((nh, c), attention.dtype)
            embs.append(e_emb)
            atts.append(e_att)
        embs = jnp.stack(embs, 0)                        # [ne, H]
        atts = jnp.stack(atts, 0)                        # [ne, nh, C]
        ht = np.asarray(hts[i])
        hs = embs[ht[:, 0]]
        ts = embs[ht[:, 1]]
        ht_att = (atts[ht[:, 0]] * atts[ht[:, 1]]).mean(1)          # [R_i, C]
        ht_att = ht_att / (ht_att.sum(1, keepdims=True) + 1e-5)
        per_doc.append((hs, ts, ht_att))
    return per_doc


def pad_and_tile(per_doc):
    """Pad each document's pair block to a multiple of TR, pre-concatenate [hs|ts],
    build the (doc-contiguous) tile->doc map and the indices of valid rows."""
    hsts_l, att_l, tile_doc, vidx = [], [], [], []
    off = 0
    for d, (h, t, a) in enumerate(per_doc):
        r = h.shape[0]
        rp = pl.cdiv(max(r, 1), TR) * TR
        pad = ((0, rp - r), (0, 0))
        hsts = jnp.concatenate([h, t], axis=-1)                    # [r, 2H]
        hsts_l.append(jnp.pad(hsts, pad).astype(jnp.bfloat16))
        att_l.append(jnp.pad(a, pad).astype(jnp.bfloat16))
        tile_doc += [d] * (rp // TR)
        vidx.append(np.arange(r) + off)
        off += rp
    return (jnp.concatenate(hsts_l, 0), jnp.concatenate(att_l, 0),
            jnp.asarray(tile_doc, jnp.int32), np.concatenate(vidx))


def at_get_label(logits, num_labels):
    """ATLoss.get_label."""
    th = logits[:, :1]
    mask = logits > th
    if num_labels > 0:
        top_v = jax.lax.top_k(logits, num_labels)[0][:, -1:]
        mask = mask & (logits >= top_v)
    out = jnp.where(mask, 1.0, 0.0)
    out = out.at[:, 0].set(jnp.where(out.sum(1) == 0.0, 1.0, 0.0))
    return out


def reference_logits(per_doc, seq_out, W_head, b_head, W_tail, b_tail, W_bil, b_bil):
    """Pure-JAX f32 reference mirroring the PyTorch forward math."""
    hs = jnp.concatenate([p[0] for p in per_doc], 0)
    ts = jnp.concatenate([p[1] for p in per_doc], 0)
    rs = jnp.concatenate([jnp.einsum('rc,ch->rh', p[2], seq_out[i])
                          for i, p in enumerate(per_doc)], 0)
    zh = jnp.tanh(jnp.tanh(jnp.concatenate([hs, rs], -1) @ W_head.T + b_head))
    zt = jnp.tanh(jnp.concatenate([ts, rs], -1) @ W_tail.T + b_tail)
    b1 = zh.reshape(-1, NB, BS)
    b2 = zt.reshape(-1, NB, BS)
    bl = (b1[:, :, :, None] * b2[:, :, None, :]).reshape(-1, E * BS)
    return bl @ W_bil.T + b_bil


# ------------------------------------- main -----------------------------------------
if __name__ == "__main__":
    key = jax.random.PRNGKey(0)
    k_seq, k_att, k1, k2, k3, k4, k5, k6 = jax.random.split(key, 8)

    # ---- stubbed encoder outputs (deterministic) ----
    seq_out = jax.random.normal(k_seq, (NDOCS, C, H), jnp.float32) * 0.5
    attention = jax.nn.softmax(
        jax.random.normal(k_att, (NDOCS, NHEADS, C, C), jnp.float32), axis=-1)

    # ---- entity mentions and head/tail pairs (Python structure, as in DocRE) ----
    entity_pos = [
        [[(0, 2), (37, 39)], [(10, 12)], [(55, 57), (80, 82)]],
        [[(5, 6)], [(20, 22), (64, 66)], [(100, 102)]],
    ]
    hts = [[[h, t] for h in range(3) for t in range(3) if h != t]
           for _ in range(NDOCS)]
    R = sum(len(x) for x in hts)

    # ---- deterministic parameter init (PyTorch Linear shapes: [out, in]) ----
    W_head = jax.random.normal(k1, (E, 2 * H), jnp.float32) * 0.05
    b_head = jax.random.normal(k2, (E,), jnp.float32) * 0.05
    W_tail = jax.random.normal(k3, (E, 2 * H), jnp.float32) * 0.05
    b_tail = jax.random.normal(k4, (E,), jnp.float32) * 0.05
    W_bil = jax.random.normal(k5, (NC, E * BS), jnp.float32) * 0.05
    b_bil = jax.random.normal(k6, (NC,), jnp.float32) * 0.05

    # ---- kernel-friendly weight layout (static one-time transforms in glue) ----
    # Folded context projection per doc: P[d] = seq_out[d] @ [Whr^T | Wtr^T]  [C, 2E]
    W_ctx = jnp.concatenate([W_head[:, H:].T, W_tail[:, H:].T], axis=1)     # [H, 2E]
    P = jnp.einsum('bch,he->bce', seq_out, W_ctx).astype(jnp.bfloat16)      # [NDOCS,C,2E]
    # Entity-side weight: [hs|ts] @ blockdiag(Whh^T, Wth^T)
    Went_np = np.zeros((2 * H, 2 * E), np.float32)
    Went_np[:H, :E] = np.asarray(W_head[:, :H]).T
    Went_np[H:, E:] = np.asarray(W_tail[:, :H]).T
    Went = jnp.asarray(Went_np, jnp.bfloat16)                               # [2H, 2E]
    bht = jnp.concatenate([b_head, b_tail])[None, :]                        # [1, 2E] f32
    # block-diagonal bilinear weight: Wbd[k*BS+j, o*E+k*BS+i] = Wbil[o, k*BS*BS+i*BS+j]
    Wr = np.asarray(W_bil).reshape(NC, NB, BS, BS)                          # [o, k, i, j]
    Wbd_np = np.zeros((E, NC * E), np.float32)
    for o in range(NC):
        for kk in range(NB):
            Wbd_np[kk * BS:(kk + 1) * BS,
                   o * E + kk * BS:o * E + (kk + 1) * BS] = Wr[o, kk].T
    Wbd = jnp.asarray(Wbd_np, jnp.bfloat16)                                 # [E, NC*E]
    # lane-padded 0/1 class-reduction matrix and bias: columns NC..LANES-1 are zero
    S2_np = np.zeros((NC * E, LANES), np.float32)
    for o in range(NC):
        S2_np[o * E:(o + 1) * E, o] = 1.0
    S2p = jnp.asarray(S2_np, jnp.bfloat16)                                  # [NC*E, 128]
    bb_np = np.zeros((1, LANES), np.float32)
    bb_np[0, :NC] = np.asarray(b_bil)
    bbp = jnp.asarray(bb_np)                                                # [1, 128]
    kparams = (Went, bht, Wbd, S2p, bbp)

    # ---- get_hrt glue, per-doc padding to TR, doc-contiguous tile->doc map ----
    per_doc = build_pairs(seq_out, attention, entity_pos, hts)
    hsts_p, att_p, tile_doc, vidx = pad_and_tile(per_doc)

    # ---- Pallas kernel: pooling + extractors + group bilinear + classifier ----
    logits_pad = docre_logits(tile_doc, hsts_p, att_p, P, kparams)
    logits = jax.block_until_ready(logits_pad[np.asarray(vidx)][:, :NC])

    # ---- ATLoss.get_label (module output when labels is None) ----
    preds = jax.block_until_ready(at_get_label(logits, K_LABELS))

    # ---- correctness check against pure-JAX f32 reference ----
    ref = reference_logits(per_doc, seq_out,
                           W_head, b_head, W_tail, b_tail, W_bil, b_bil)
    np.testing.assert_allclose(np.asarray(logits), np.asarray(ref),
                               rtol=5e-2, atol=5e-2)
    assert preds.shape == (R, NC)

    print("KERNEL_OK")
</pallas_src>

<mosaic_0001>
module attributes {stable_mosaic.version = 11 : i64} {
  func.func @docre_pair_kernel(%arg0: i32, %arg1: memref<2xi32, #tpu.memory_space<smem>>, %arg2: memref<256x128xbf16, #tpu.memory_space<vmem>>, %arg3: memref<256x128xbf16, #tpu.memory_space<vmem>>, %arg4: memref<1x128x128xbf16, #tpu.memory_space<vmem>>, %arg5: memref<128x128xbf16, #tpu.memory_space<vmem>>, %arg6: memref<1x128xf32, #tpu.memory_space<vmem>>, %arg7: memref<64x512xbf16, #tpu.memory_space<vmem>>, %arg8: memref<512x128xbf16, #tpu.memory_space<vmem>>, %arg9: memref<1x128xf32, #tpu.memory_space<vmem>>, %arg10: memref<256x128xf32, #tpu.memory_space<vmem>>) attributes {dimension_semantics = [#tpu.dimension_semantics<parallel>], iteration_bounds = array<i64: 2>, scalar_prefetch = 1 : i64, scratch_operands = 0 : i64, tpu.core_type = #tpu.core_type<tc>, window_params = [{transform_indices = @transform_0, window_bounds = array<i64: 256, 128>}, {transform_indices = @transform_1, window_bounds = array<i64: 256, 128>}, {transform_indices = @transform_2, window_bounds = array<i64: 1, 128, 128>}, {pipeline_mode = #tpu.pipeline_mode<synchronous>, transform_indices = @transform_3, window_bounds = array<i64: 128, 128>}, {pipeline_mode = #tpu.pipeline_mode<synchronous>, transform_indices = @transform_4, window_bounds = array<i64: 1, 128>}, {pipeline_mode = #tpu.pipeline_mode<synchronous>, transform_indices = @transform_5, window_bounds = array<i64: 64, 512>}, {pipeline_mode = #tpu.pipeline_mode<synchronous>, transform_indices = @transform_6, window_bounds = array<i64: 512, 128>}, {pipeline_mode = #tpu.pipeline_mode<synchronous>, transform_indices = @transform_7, window_bounds = array<i64: 1, 128>}, {transform_indices = @transform_8, window_bounds = array<i64: 256, 128>}]} {
    %c0 = arith.constant 0 : index
    %c0_0 = arith.constant 0 : index
    %0 = vector.load %arg3[%c0, %c0_0] : memref<256x128xbf16, #tpu.memory_space<vmem>>, vector<256x128xbf16>
    %c0_1 = arith.constant 0 : index
    %c0_2 = arith.constant 0 : index
    %c0_3 = arith.constant 0 : index
    %1 = vector.load %arg4[%c0_1, %c0_2, %c0_3] : memref<1x128x128xbf16, #tpu.memory_space<vmem>>, vector<1x128x128xbf16>
    %2 = vector.shape_cast %1 : vector<1x128x128xbf16> to vector<128x128xbf16>
    %cst = arith.constant dense<0.000000e+00> : vector<256x128xf32>
    %3 = tpu.matmul %0, %2, %cst {dimension_numbers = #tpu.dot_dimension_numbers<[1], [0], [0], [1], [0, 0, 1, 1], [], []>} : vector<256x128xbf16>, vector<128x128xbf16>, vector<256x128xf32> -> vector<256x128xf32>
    %c0_4 = arith.constant 0 : index
    %c0_5 = arith.constant 0 : index
    %4 = vector.load %arg2[%c0_4, %c0_5] : memref<256x128xbf16, #tpu.memory_space<vmem>>, vector<256x128xbf16>
    %c0_6 = arith.constant 0 : index
    %c0_7 = arith.constant 0 : index
    %5 = vector.load %arg5[%c0_6, %c0_7] : memref<128x128xbf16, #tpu.memory_space<vmem>>, vector<128x128xbf16>
    %cst_8 = arith.constant dense<0.000000e+00> : vector<256x128xf32>
    %6 = tpu.matmul %4, %5, %cst_8 {dimension_numbers = #tpu.dot_dimension_numbers<[1], [0], [0], [1], [0, 0, 1, 1], [], []>} : vector<256x128xbf16>, vector<128x128xbf16>, vector<256x128xf32> -> vector<256x128xf32>
    %7 = arith.addf %3, %6 : vector<256x128xf32>
    %c0_9 = arith.constant 0 : index
    %c0_10 = arith.constant 0 : index
    %8 = vector.load %arg6[%c0_9, %c0_10] : memref<1x128xf32, #tpu.memory_space<vmem>>, vector<1x128xf32>
    %9 = vector.broadcast %8 : vector<1x128xf32> to vector<256x128xf32>
    %10 = arith.addf %7, %9 : vector<256x128xf32>
    %11 = vector.extract_strided_slice %10 {offsets = [0, 0], sizes = [256, 64], strides = [1, 1]} : vector<256x128xf32> to vector<256x64xf32>
    %12 = math.tanh %11 : vector<256x64xf32>
    %13 = math.tanh %12 : vector<256x64xf32>
    %14 = vector.extract_strided_slice %10 {offsets = [0, 64], sizes = [256, 64], strides = [1, 1]} : vector<256x128xf32> to vector<256x64xf32>
    %15 = math.tanh %14 : vector<256x64xf32>
    %16 = arith.truncf %15 : vector<256x64xf32> to vector<256x64xbf16>
    %c0_11 = arith.constant 0 : index
    %c0_12 = arith.constant 0 : index
    %17 = vector.load %arg7[%c0_11, %c0_12] : memref<64x512xbf16, #tpu.memory_space<vmem>>, vector<64x512xbf16>
    %cst_13 = arith.constant dense<0.000000e+00> : vector<256x512xf32>
    %18 = tpu.matmul %16, %17, %cst_13 {dimension_numbers = #tpu.dot_dimension_numbers<[1], [0], [0], [1], [0, 0, 1, 1], [], []>} : vector<256x64xbf16>, vector<64x512xbf16>, vector<256x512xf32> -> vector<256x512xf32>
    %19 = arith.truncf %13 : vector<256x64xf32> to vector<256x64xbf16>
    %20 = tpu.concatenate %19, %19, %19, %19, %19, %19, %19, %19 in 1 : vector<256x64xbf16>, vector<256x64xbf16>, vector<256x64xbf16>, vector<256x64xbf16>, vector<256x64xbf16>, vector<256x64xbf16>, vector<256x64xbf16>, vector<256x64xbf16> -> vector<256x512xbf16>
    %21 = arith.truncf %18 : vector<256x512xf32> to vector<256x512xbf16>
    %22 = arith.mulf %20, %21 : vector<256x512xbf16>
    %c0_14 = arith.constant 0 : index
    %c0_15 = arith.constant 0 : index
    %23 = vector.load %arg8[%c0_14, %c0_15] : memref<512x128xbf16, #tpu.memory_space<vmem>>, vector<512x128xbf16>
    %cst_16 = arith.constant dense<0.000000e+00> : vector<256x128xf32>
    %24 = tpu.matmul %22, %23, %cst_16 {dimension_numbers = #tpu.dot_dimension_numbers<[1], [0], [0], [1], [0, 0, 1, 1], [], []>} : vector<256x512xbf16>, vector<512x128xbf16>, vector<256x128xf32> -> vector<256x128xf32>
    %c0_17 = arith.constant 0 : index
    %c0_18 = arith.constant 0 : index
    %25 = vector.load %arg9[%c0_17, %c0_18] : memref<1x128xf32, #tpu.memory_space<vmem>>, vector<1x128xf32>
    %26 = vector.broadcast %25 : vector<1x128xf32> to vector<256x128xf32>
    %27 = arith.addf %24, %26 : vector<256x128xf32>
    %c0_19 = arith.constant 0 : index
    %c0_20 = arith.constant 0 : index
    %28 = vector.load %arg10[%c0_19, %c0_20] : memref<256x128xf32, #tpu.memory_space<vmem>>, vector<256x128xf32>
    tpu.vector_store %arg10[%c0_19, %c0_20], %27 {strides = array<i32>} : memref<256x128xf32, #tpu.memory_space<vmem>>, vector<256x128xf32>,
    return
  }
  func.func @transform_0(%arg0: i32, %arg1: memref<2xi32, #tpu.memory_space<smem>>) -> (i32, i32) {
    %c0_i32 = arith.constant 0 : i32
    %c0_i32_0 = arith.constant 0 : i32
    return %arg0, %c0_i32 : i32, i32
  }
  func.func @transform_1(%arg0: i32, %arg1: memref<2xi32, #tpu.memory_space<smem>>) -> (i32, i32) {
    %c0_i32 = arith.constant 0 : i32
    %c0_i32_0 = arith.constant 0 : i32
    return %arg0, %c0_i32 : i32, i32
  }
  func.func @transform_2(%arg0: i32, %arg1: memref<2xi32, #tpu.memory_space<smem>>) -> (i32, i32, i32) {
    %0 = arith.index_cast %arg0 : i32 to index
    %1 = memref.load %arg1[%0] : memref<2xi32, #tpu.memory_space<smem>>
    %c0_i32 = arith.constant 0 : i32
    %c0_i32_0 = arith.constant 0 : i32
    %c0_i32_1 = arith.constant 0 : i32
    return %1, %c0_i32, %c0_i32_0 : i32, i32, i32
  }
  func.func @transform_3(%arg0: i32, %arg1: memref<2xi32, #tpu.memory_space<smem>>) -> (i32, i32) {
    %c0_i32 = arith.constant 0 : i32
    %c0_i32_0 = arith.constant 0 : i32
    %c0_i32_1 = arith.constant 0 : i32
    return %c0_i32, %c0_i32_0 : i32, i32
  }
  func.func @transform_4(%arg0: i32, %arg1: memref<2xi32, #tpu.memory_space<smem>>) -> (i32, i32) {
    %c0_i32 = arith.constant 0 : i32
    %c0_i32_0 = arith.constant 0 : i32
    %c0_i32_1 = arith.constant 0 : i32
    return %c0_i32, %c0_i32_0 : i32, i32
  }
  func.func @transform_5(%arg0: i32, %arg1: memref<2xi32, #tpu.memory_space<smem>>) -> (i32, i32) {
    %c0_i32 = arith.constant 0 : i32
    %c0_i32_0 = arith.constant 0 : i32
    %c0_i32_1 = arith.constant 0 : i32
    return %c0_i32, %c0_i32_0 : i32, i32
  }
  func.func @transform_6(%arg0: i32, %arg1: memref<2xi32, #tpu.memory_space<smem>>) -> (i32, i32) {
    %c0_i32 = arith.constant 0 : i32
    %c0_i32_0 = arith.constant 0 : i32
    %c0_i32_1 = arith.constant 0 : i32
    return %c0_i32, %c0_i32_0 : i32, i32
  }
  func.func @transform_7(%arg0: i32, %arg1: memref<2xi32, #tpu.memory_space<smem>>) -> (i32, i32) {
    %c0_i32 = arith.constant 0 : i32
    %c0_i32_0 = arith.constant 0 : i32
    %c0_i32_1 = arith.constant 0 : i32
    return %c0_i32, %c0_i32_0 : i32, i32
  }
  func.func @transform_8(%arg0: i32, %arg1: memref<2xi32, #tpu.memory_space<smem>>) -> (i32, i32) {
    %c0_i32 = arith.constant 0 : i32
    %c0_i32_0 = arith.constant 0 : i32
    return %arg0, %c0_i32 : i32, i32
  }
}

</mosaic_0001>

<llo_original>
// kernel: tpu_custom_call.1
$region0: #{tpu_custom_call.1}
  #allocation0 [shape = 'u32[]', space=smem, size = 0x4, offset = 0x4, fixed_abs, tag = 'smem constant byte address 0x4 - core index']
  #allocation1 [shape = 'u32[144,128]{1,0:T(1,128)}', space=vmem, size = 0x12000, scoped, tag = 'internal scratch']
  #allocation2 [shape = 's32[1]{0}', space=sflag, size = 0x4, scoped, tag = 'scoped memory for tpu_custom_call.1']
  #allocation3 [shape = 'u8[512]{0}', space=smem, size = 0x200, scoped, tag = 'prefetched SMEM operand 0']
  %s0 = inlined_call_operand.hbm [shape: s32[2], index: 0, kind: input, shape index: {}]
  %s1 = inlined_call_operand.hbm [shape: bf16[512,128], index: 1, kind: input, shape index: {}]
  %s2 = inlined_call_operand.hbm [shape: bf16[512,128], index: 2, kind: input, shape index: {}]
  %s3 = inlined_call_operand.hbm [shape: bf16[2,128,128], index: 3, kind: input, shape index: {}]
  %s4 = inlined_call_operand.hbm [shape: bf16[128,128], index: 4, kind: input, shape index: {}]
  %s5 = inlined_call_operand.vmem [shape: f32[1,128], index: 5, kind: input, shape index: {}]
  %s6 = inlined_call_operand.hbm [shape: bf16[64,512], index: 6, kind: input, shape index: {}]
  %s7 = inlined_call_operand.hbm [shape: bf16[512,128], index: 7, kind: input, shape index: {}]
  %s8 = inlined_call_operand.vmem [shape: f32[1,128], index: 8, kind: input, shape index: {}]
  %s9 = inlined_call_operand.hbm [shape: f32[512,128], index: 9, kind: output, shape index: {}]
  %s10 = sld [smem:[#allocation0]]
  $region89: #{tpu_custom_call.1} parent=0
    _
  %s12 = ssub.s32 1, %s10
  %s13 = scalar_select 0, %s12, %s10
  %15 = dma.hbm_to_smem %s0, 16, [#allocation3], [#allocation2]
  %16 = dma.done [#allocation2], 16
  %17 = sfence
  $region1: #{tpu_custom_call.1} parent=0
    #allocation4 [shape = 'u8[131072]{0}', space=vmem, size = 0x20000, scoped, tag = 'input window, operand 1']
    #allocation5 [shape = 's32[2]{0}', space=sflag, size = 0x8, scoped, tag = 'scoped memory for tpu_custom_call.1']
    #allocation6 [shape = 's32[2]{0}', space=sflag, size = 0x8, scoped, tag = 'scoped memory for tpu_custom_call.1']
    #allocation7 [shape = 'u8[131072]{0}', space=vmem, size = 0x20000, scoped, tag = 'input window, operand 2']
    #allocation8 [shape = 's32[2]{0}', space=sflag, size = 0x8, scoped, tag = 'scoped memory for tpu_custom_call.1']
    #allocation9 [shape = 'u8[65536]{0}', space=vmem, size = 0x10000, scoped, tag = 'input window, operand 3']
    #allocation10 [shape = 'u8[32768]{0}', space=vmem, size = 0x8000, scoped, tag = 'input window, operand 4, single buffered']
    #allocation11 [shape = 's32[1]{0}', space=sflag, size = 0x4, scoped, tag = 'scoped memory for tpu_custom_call.1']
    #allocation12 [shape = 'u8[65536]{0}', space=vmem, size = 0x10000, scoped, tag = 'input window, operand 6, single buffered']
    #allocation13 [shape = 'u8[131072]{0}', space=vmem, size = 0x20000, scoped, tag = 'input window, operand 7, single buffered']
    #allocation14 [shape = 's32[1]{0}', space=sflag, size = 0x4, scoped, tag = 'scoped memory for tpu_custom_call.1']
    #allocation15 [shape = 'u8[262144]{0}', space=vmem, size = 0x40000, scoped, tag = 'output window, operand 0']
    %18 = vsyncpa [#allocation5], 0
    %s19 = scalar_lea.sflag [#allocation5], 1
    %20 = vsyncpa %s19, 0
    %21 = vsyncpa [#allocation8], 0
    %s22 = scalar_lea.sflag [#allocation8], 1
    %23 = vsyncpa %s22, 0
    %24 = vsyncpa [#allocation11], 0
    %25 = vsyncpa [#allocation14], 0
    %26 = vsyncpa [#allocation6], 0
    %s27 = scalar_lea.sflag [#allocation6], 1
    %28 = vsyncpa %s27, 0
    loop: start=0, step=1, limit=4
    $region2: #{tpu_custom_call.1} parent=1 // loop_pre_header
      _
    $region3: #{tpu_custom_call.1} parent=1 // loop_header
      %s30 = sphi 0, %s34
      %p31 = scmp.ge.s32.totalorder %s30, 4
      %s40 = sphi 0, %s42
      %s43 = sphi 0, %s40
      %s44 = sphi 0, %s43
      %s60 = sphi 0, %s44
      %s66 = sphi 0, %s68
      %s69 = sphi 0, %s66
      %s70 = sphi 0, %s69
      %s86 = sphi 0, %s70
      %s94 = sphi 0, %s96
      %s97 = sphi 0, %s94
      %s98 = sphi 0, %s97
      %s114 = sphi 0, %s98
      %s118 = sphi 0, %s118
      %s120 = sphi 0, %s118
      %s121 = sphi 0, %s120
      %s135 = sphi 0, %s121
      %s139 = sphi 0, %s139
      %s141 = sphi 0, %s139
      %s142 = sphi 0, %s141
      %s156 = sphi 0, %s142
      %s160 = sphi 0, %s160
      %s162 = sphi 0, %s160
      %s163 = sphi 0, %s162
      %s177 = sphi 0, %s163
      %s181 = sphi 0, %s181
      %s183 = sphi 0, %s181
      %s184 = sphi 0, %s183
      %s198 = sphi 0, %s184
      %s202 = sphi 0, %s202
      %s204 = sphi 0, %s202
      %s205 = sphi 0, %s204
      %s219 = sphi 0, %s205
      %s225 = sphi 0, %s227
      %s228 = sphi 0, %s225
      %s229 = sphi 0, %s228
      %s245 = sphi 0, %s229
    $region4: #{tpu_custom_call.1} parent=1 // loop_header_branch
      %33 = sbr.rel (%p31) target = $region8
    $region5: #{tpu_custom_call.1} parent=1 // loop_body
      %s35 = ssub.s32 %s30, 1
      %s36 = ssub.s32 %s30, 2
      %s37 = sadd.s32 %s30, 1
      %s38 = ssub.s32 %s30, %s37
      %p39 = scmp.eq.s32.totalorder %s38, 0
      %s41 = sadd.s32 %s40, 1
      %s42 = scalar_select %p39, %s40, %s41
      %p45 = pneg %p39
      %p46 = scmp.eq.s32.totalorder %s30, 1
      %p47 = por %p45, %p46
      %p48 = scmp.ne.s32.totalorder %s40, %s43
      %p49 = scmp.eq.s32.totalorder %s30, 0
      %p50 = por %p48, %p49
      %p51 = scmp.ne.s32.totalorder %s40, %s43
      %p52 = scmp.eq.s32.totalorder %s35, 1
      %p53 = por %p51, %p52
      %p54 = scmp.ne.s32.totalorder %s43, %s44
      %p55 = scmp.eq.s32.totalorder %s35, 0
      %p56 = por %p54, %p55
      %p57 = scmp.ne.s32.totalorder %s43, %s44
      %p58 = scmp.eq.s32.totalorder %s36, 1
      %p59 = por %p57, %p58
      %p61 = scmp.ne.s32.totalorder %s44, %s60
      %p62 = scmp.eq.s32.totalorder %s36, 0
      %p63 = por %p61, %p62
      %s64 = ssub.s32 %s30, %s37
      %p65 = scmp.eq.s32.totalorder %s64, 0
      %s67 = sadd.s32 %s66, 1
      %s68 = scalar_select %p65, %s66, %s67
      %p71 = pneg %p65
      %p72 = scmp.eq.s32.totalorder %s30, 1
      %p73 = por %p71, %p72
      %p74 = scmp.ne.s32.totalorder %s66, %s69
      %p75 = scmp.eq.s32.totalorder %s30, 0
      %p76 = por %p74, %p75
      %p77 = scmp.ne.s32.totalorder %s66, %s69
      %p78 = scmp.eq.s32.totalorder %s35, 1
      %p79 = por %p77, %p78
      %p80 = scmp.ne.s32.totalorder %s69, %s70
      %p81 = scmp.eq.s32.totalorder %s35, 0
      %p82 = por %p80, %p81
      %p83 = scmp.ne.s32.totalorder %s69, %s70
      %p84 = scmp.eq.s32.totalorder %s36, 1
      %p85 = por %p83, %p84
      %p87 = scmp.ne.s32.totalorder %s70, %s86
      %p88 = scmp.eq.s32.totalorder %s36, 0
      %p89 = por %p87, %p88
      %s90 = sld [smem:[#allocation3 + %s30]]
      %s91 = sld [smem:[#allocation3 + %s37]]
      %s92 = ssub.s32 %s90, %s91
      %p93 = scmp.eq.s32.totalorder %s92, 0
      %s95 = sadd.s32 %s94, 1
      %s96 = scalar_select %p93, %s94, %s95
      %p99 = pneg %p93
      %p100 = scmp.eq.s32.totalorder %s30, 1
      %p101 = por %p99, %p100
      %p102 = scmp.ne.s32.totalorder %s94, %s97
      %p103 = scmp.eq.s32.totalorder %s30, 0
      %p104 = por %p102, %p103
      %p105 = scmp.ne.s32.totalorder %s94, %s97
      %p106 = scmp.eq.s32.totalorder %s35, 1
      %p107 = por %p105, %p106
      %p108 = scmp.ne.s32.totalorder %s97, %s98
      %p109 = scmp.eq.s32.totalorder %s35, 0
      %p110 = por %p108, %p109
      %p111 = scmp.ne.s32.totalorder %s97, %s98
      %p112 = scmp.eq.s32.totalorder %s36, 1
      %p113 = por %p111, %p112
      %p115 = scmp.ne.s32.totalorder %s98, %s114
      %p116 = scmp.eq.s32.totalorder %s36, 0
      %p117 = por %p115, %p116
      %s119 = sadd.s32 %s118, 1
      %p122 = scmp.eq.s32.totalorder %s30, 1
      %p123 = scmp.ne.s32.totalorder %s118, %s120
      %p124 = scmp.eq.s32.totalorder %s30, 0
      %p125 = por %p123, %p124
      %p126 = scmp.ne.s32.totalorder %s118, %s120
      %p127 = scmp.eq.s32.totalorder %s35, 1
      %p128 = por %p126, %p127
      %p129 = scmp.ne.s32.totalorder %s120, %s121
      %p130 = scmp.eq.s32.totalorder %s35, 0
      %p131 = por %p129, %p130
      %p132 = scmp.ne.s32.totalorder %s120, %s121
      %p133 = scmp.eq.s32.totalorder %s36, 1
      %p134 = por %p132, %p133
      %p136 = scmp.ne.s32.totalorder %s121, %s135
      %p137 = scmp.eq.s32.totalorder %s36, 0
      %p138 = por %p136, %p137
      %s140 = sadd.s32 %s139, 1
      %p143 = scmp.eq.s32.totalorder %s30, 1
      %p144 = scmp.ne.s32.totalorder %s139, %s141
      %p145 = scmp.eq.s32.totalorder %s30, 0
      %p146 = por %p144, %p145
      %p147 = scmp.ne.s32.totalorder %s139, %s141
      %p148 = scmp.eq.s32.totalorder %s35, 1
      %p149 = por %p147, %p148
      %p150 = scmp.ne.s32.totalorder %s141, %s142
      %p151 = scmp.eq.s32.totalorder %s35, 0
      %p152 = por %p150, %p151
      %p153 = scmp.ne.s32.totalorder %s141, %s142
      %p154 = scmp.eq.s32.totalorder %s36, 1
      %p155 = por %p153, %p154
      %p157 = scmp.ne.s32.totalorder %s142, %s156
      %p158 = scmp.eq.s32.totalorder %s36, 0
      %p159 = por %p157, %p158
      %s161 = sadd.s32 %s160, 1
      %p164 = scmp.eq.s32.totalorder %s30, 1
      %p165 = scmp.ne.s32.totalorder %s160, %s162
      %p166 = scmp.eq.s32.totalorder %s30, 0
      %p167 = por %p165, %p166
      %p168 = scmp.ne.s32.totalorder %s160, %s162
      %p169 = scmp.eq.s32.totalorder %s35, 1
      %p170 = por %p168, %p169
      %p171 = scmp.ne.s32.totalorder %s162, %s163
      %p172 = scmp.eq.s32.totalorder %s35, 0
      %p173 = por %p171, %p172
      %p174 = scmp.ne.s32.totalorder %s162, %s163
      %p175 = scmp.eq.s32.totalorder %s36, 1
      %p176 = por %p174, %p175
      %p178 = scmp.ne.s32.totalorder %s163, %s177
      %p179 = scmp.eq.s32.totalorder %s36, 0
      %p180 = por %p178, %p179
      %s182 = sadd.s32 %s181, 1
      %p185 = scmp.eq.s32.totalorder %s30, 1
      %p186 = scmp.ne.s32.totalorder %s181, %s183
      %p187 = scmp.eq.s32.totalorder %s30, 0
      %p188 = por %p186, %p187
      %p189 = scmp.ne.s32.totalorder %s181, %s183
      %p190 = scmp.eq.s32.totalorder %s35, 1
      %p191 = por %p189, %p190
      %p192 = scmp.ne.s32.totalorder %s183, %s184
      %p193 = scmp.eq.s32.totalorder %s35, 0
      %p194 = por %p192, %p193
      %p195 = scmp.ne.s32.totalorder %s183, %s184
      %p196 = scmp.eq.s32.totalorder %s36, 1
      %p197 = por %p195, %p196
      %p199 = scmp.ne.s32.totalorder %s184, %s198
      %p200 = scmp.eq.s32.totalorder %s36, 0
      %p201 = por %p199, %p200
      %s203 = sadd.s32 %s202, 1
      %p206 = scmp.eq.s32.totalorder %s30, 1
      %p207 = scmp.ne.s32.totalorder %s202, %s204
      %p208 = scmp.eq.s32.totalorder %s30, 0
      %p209 = por %p207, %p208
      %p210 = scmp.ne.s32.totalorder %s202, %s204
      %p211 = scmp.eq.s32.totalorder %s35, 1
      %p212 = por %p210, %p211
      %p213 = scmp.ne.s32.totalorder %s204, %s205
      %p214 = scmp.eq.s32.totalorder %s35, 0
      %p215 = por %p213, %p214
      %p216 = scmp.ne.s32.totalorder %s204, %s205
      %p217 = scmp.eq.s32.totalorder %s36, 1
      %p218 = por %p216, %p217
      %p220 = scmp.ne.s32.totalorder %s205, %s219
      %p221 = scmp.eq.s32.totalorder %s36, 0
      %p222 = por %p220, %p221
      %s223 = ssub.s32 %s30, %s37
      %p224 = scmp.eq.s32.totalorder %s223, 0
      %s226 = sadd.s32 %s225, 1
      %s227 = scalar_select %p224, %s225, %s226
      %p230 = pneg %p224
      %p231 = scmp.eq.s32.totalorder %s30, 1
      %p232 = por %p230, %p231
      %p233 = scmp.ne.s32.totalorder %s225, %s228
      %p234 = scmp.eq.s32.totalorder %s30, 0
      %p235 = por %p233, %p234
      %p236 = scmp.ne.s32.totalorder %s225, %s228
      %p237 = scmp.eq.s32.totalorder %s35, 1
      %p238 = por %p236, %p237
      %p239 = scmp.ne.s32.totalorder %s228, %s229
      %p240 = scmp.eq.s32.totalorder %s35, 0
      %p241 = por %p239, %p240
      %p242 = scmp.ne.s32.totalorder %s228, %s229
      %p243 = scmp.eq.s32.totalorder %s36, 1
      %p244 = por %p242, %p243
      %p246 = scmp.ne.s32.totalorder %s229, %s245
      %p247 = scmp.eq.s32.totalorder %s36, 0
      %p248 = por %p246, %p247
      %p249 = scmp.le.s32.totalorder 1, %s30
      %p250 = scmp.lt.s32.totalorder %s30, 3
      %p251 = pnand %p249, %p250
      %p252 = pneg %p251
      // Predicated region
      $region9: #{tpu_custom_call.1} parent=5 // pred_check
        _
      $region10: #{tpu_custom_call.1} parent=5 // pred_check_branch
        %254 = sbr.rel (%p251) target = $region12
      $region11: #{tpu_custom_call.1} parent=5 // pred_region
        %s255 = ssub.s32 %s30, 1
        // Predicated region
        $region13: #{tpu_custom_call.1} parent=11 // pred_check
          %p256 = pneg %p131
        $region14: #{tpu_custom_call.1} parent=11 // pred_check_branch
          %258 = sbr.rel (%p256) target = $region16
        $region15: #{tpu_custom_call.1} parent=11 // pred_region
          %s260 = ssub.s32 1024, 1024
          %261 = vsyncadd [#allocation11], %s260
          %s262 = sshll.u32 [#allocation10], 4
          %s263 = int_to_ptr.vmem [resolvable:$true] %s262
          %268 = dma.hbm_to_vmem [thread:$0]  %s4, 1024, %s263, [#allocation11], 64, 64, 4
        $region16: #{tpu_custom_call.1} parent=11 // pred_fallthru
          _
        // Predicated region
        $region17: #{tpu_custom_call.1} parent=11 // pred_check
          %p269 = pneg %p152
        $region18: #{tpu_custom_call.1} parent=11 // pred_check_branch
          %271 = sbr.rel (%p269) target = $region20
        $region19: #{tpu_custom_call.1} parent=11 // pred_region
          _
        $region20: #{tpu_custom_call.1} parent=11 // pred_fallthru
          _
        // Predicated region
        $region21: #{tpu_custom_call.1} parent=11 // pred_check
          %p272 = pneg %p173
        $region22: #{tpu_custom_call.1} parent=11 // pred_check_branch
          %274 = sbr.rel (%p272) target = $region24
        $region23: #{tpu_custom_call.1} parent=11 // pred_region
          %s276 = ssub.s32 2048, 2048
          %277 = vsyncadd [#allocation11], %s276
          %s278 = sshll.u32 [#allocation12], 4
          %s279 = int_to_ptr.vmem [resolvable:$true] %s278
          %284 = dma.hbm_to_vmem [thread:$0]  %s6, 2048, %s279, [#allocation11], 256, 256, 16
        $region24: #{tpu_custom_call.1} parent=11 // pred_fallthru
          _
        // Predicated region
        $region25: #{tpu_custom_call.1} parent=11 // pred_check
          %p285 = pneg %p194
        $region26: #{tpu_custom_call.1} parent=11 // pred_check_branch
          %287 = sbr.rel (%p285) target = $region28
        $region27: #{tpu_custom_call.1} parent=11 // pred_region
          %s289 = ssub.s32 4096, 4096
          %290 = vsyncadd [#allocation14], %s289
          %s291 = sshll.u32 [#allocation13], 4
          %s292 = int_to_ptr.vmem [resolvable:$true] %s291
          %297 = dma.hbm_to_vmem [thread:$0]  %s7, 4096, %s292, [#allocation14], 64, 64, 4
        $region28: #{tpu_custom_call.1} parent=11 // pred_fallthru
          _
        // Predicated region
        $region29: #{tpu_custom_call.1} parent=11 // pred_check
          %p298 = pneg %p215
        $region30: #{tpu_custom_call.1} parent=11 // pred_check_branch
          %300 = sbr.rel (%p298) target = $region32
        $region31: #{tpu_custom_call.1} parent=11 // pred_region
          _
        $region32: #{tpu_custom_call.1} parent=11 // pred_fallthru
          _
      $region12: #{tpu_custom_call.1} parent=5 // pred_fallthru
        _
      %p301 = scmp.lt.s32.totalorder %s30, 2
      // Predicated region
      $region33: #{tpu_custom_call.1} parent=5 // pred_check
        %p302 = pneg %p301
      $region34: #{tpu_custom_call.1} parent=5 // pred_check_branch
        %304 = sbr.rel (%p302) target = $region36
      $region35: #{tpu_custom_call.1} parent=5 // pred_region
        // Predicated region
        $region37: #{tpu_custom_call.1} parent=35 // pred_check
          %p305 = pneg %p50
        $region38: #{tpu_custom_call.1} parent=35 // pred_check_branch
          %307 = sbr.rel (%p305) target = $region40
        $region39: #{tpu_custom_call.1} parent=35 // pred_region
          %s308 = sand.u32 %s40, 1
          %s309 = scalar_lea.sflag [#allocation5], %s308
          %s310 = sand.u32 %s40, 1
          %s311 = smul.addr %s310, 128
          %s312 = scalar_lea.vmem [#allocation4], %s311
          %s313 = smul.u32 32, %s30
          %s315 = ssub.s32 2048, 2048
          %316 = vsyncadd %s309, %s315
          %s317 = smul.addr %s313, 64
          %s318 = scalar_lea.hbm %s1, %s317
          %s319 = sshll.u32 %s312, 4
          %s320 = int_to_ptr.vmem [resolvable:$true] %s319
          %325 = dma.hbm_to_vmem [thread:$0]  %s318, 2048, %s320, %s309, 64, 64, 4
        $region40: #{tpu_custom_call.1} parent=35 // pred_fallthru
          _
        // Predicated region
        $region41: #{tpu_custom_call.1} parent=35 // pred_check
          %p326 = pneg %p76
        $region42: #{tpu_custom_call.1} parent=35 // pred_check_branch
          %328 = sbr.rel (%p326) target = $region44
        $region43: #{tpu_custom_call.1} parent=35 // pred_region
          %s329 = sand.u32 %s30, 1
          %s330 = scalar_lea.sflag [#allocation8], %s329
          %s331 = sand.u32 %s66, 1
          %s332 = smul.addr %s331, 128
          %s333 = scalar_lea.vmem [#allocation7], %s332
          %s334 = smul.u32 32, %s30
          %s336 = ssub.s32 2048, 2048
          %337 = vsyncadd %s330, %s336
          %s338 = smul.addr %s334, 64
          %s339 = scalar_lea.hbm %s2, %s338
          %s340 = sshll.u32 %s333, 4
          %s341 = int_to_ptr.vmem [resolvable:$true] %s340
          %346 = dma.hbm_to_vmem [thread:$0]  %s339, 2048, %s341, %s330, 64, 64, 4
        $region44: #{tpu_custom_call.1} parent=35 // pred_fallthru
          _
        // Predicated region
        $region45: #{tpu_custom_call.1} parent=35 // pred_check
          %p347 = pneg %p104
        $region46: #{tpu_custom_call.1} parent=35 // pred_check_branch
          %349 = sbr.rel (%p347) target = $region48
        $region47: #{tpu_custom_call.1} parent=35 // pred_region
          %s350 = sand.u32 %s30, 1
          %s351 = scalar_lea.sflag [#allocation8], %s350
          %s352 = sand.u32 %s94, 1
          %s353 = smul.addr %s352, 64
          %s354 = scalar_lea.vmem [#allocation9], %s353
          %s355 = sld [smem:[#allocation3 + %s30]]
          %s357 = ssub.s32 1024, 1024
          %358 = vsyncadd %s351, %s357
          %s359 = smul.addr %s355, 16
          %s360 = smul.addr %s359, 64
          %s361 = scalar_lea.hbm %s3, %s360
          %s362 = sshll.u32 %s354, 4
          %s363 = int_to_ptr.vmem [resolvable:$true] %s362
          %368 = dma.hbm_to_vmem [thread:$0]  %s361, 1024, %s363, %s351, 64, 64, 4
        $region48: #{tpu_custom_call.1} parent=35 // pred_fallthru
          _
      $region36: #{tpu_custom_call.1} parent=5 // pred_fallthru
        _
      %p369 = scmp.le.s32.totalorder 1, %s30
      %p370 = scmp.lt.s32.totalorder %s30, 3
      %p371 = pnand %p369, %p370
      %p372 = pneg %p371
      // Predicated region
      $region49: #{tpu_custom_call.1} parent=5 // pred_check
        _
      $region50: #{tpu_custom_call.1} parent=5 // pred_check_branch
        %374 = sbr.rel (%p371) target = $region52
      $region51: #{tpu_custom_call.1} parent=5 // pred_region
        %s375 = ssub.s32 %s30, 1
        %s376 = sand.u32 %s43, 1
        %s377 = scalar_lea.sflag [#allocation5], %s376
        %s378 = sand.u32 %s43, 1
        %s379 = smul.addr %s378, 128
        %s380 = scalar_lea.vmem [#allocation4], %s379
        // Predicated region
        $region53: #{tpu_custom_call.1} parent=51 // pred_check
          %p381 = pneg %p56
        $region54: #{tpu_custom_call.1} parent=51 // pred_check_branch
          %383 = sbr.rel (%p381) target = $region56
        $region55: #{tpu_custom_call.1} parent=51 // pred_region
          %384 = dma.done %s377, 2048
        $region56: #{tpu_custom_call.1} parent=51 // pred_fallthru
          _
        %s385 = sand.u32 %s35, 1
        %s386 = scalar_lea.sflag [#allocation8], %s385
        %s387 = sand.u32 %s69, 1
        %s388 = smul.addr %s387, 128
        %s389 = scalar_lea.vmem [#allocation7], %s388
        // Predicated region
        $region57: #{tpu_custom_call.1} parent=51 // pred_check
          %p390 = pneg %p82
        $region58: #{tpu_custom_call.1} parent=51 // pred_check_branch
          %392 = sbr.rel (%p390) target = $region60
        $region59: #{tpu_custom_call.1} parent=51 // pred_region
          %393 = dma.done %s386, 2048
        $region60: #{tpu_custom_call.1} parent=51 // pred_fallthru
          _
        %s394 = sand.u32 %s35, 1
        %s395 = scalar_lea.sflag [#allocation8], %s394
        %s396 = sand.u32 %s97, 1
        %s397 = smul.addr %s396, 64
        %s398 = scalar_lea.vmem [#allocation9], %s397
        // Predicated region
        $region61: #{tpu_custom_call.1} parent=51 // pred_check
          %p399 = pneg %p110
        $region62: #{tpu_custom_call.1} parent=51 // pred_check_branch
          %401 = sbr.rel (%p399) target = $region64
        $region63: #{tpu_custom_call.1} parent=51 // pred_region
          %402 = dma.done %s395, 1024
        $region64: #{tpu_custom_call.1} parent=51 // pred_fallthru
          _
        // Predicated region
        $region65: #{tpu_custom_call.1} parent=51 // pred_check
          %p403 = pneg %p131
        $region66: #{tpu_custom_call.1} parent=51 // pred_check_branch
          %405 = sbr.rel (%p403) target = $region68
        $region67: #{tpu_custom_call.1} parent=51 // pred_region
          %406 = dma.done [#allocation11], 1024
        $region68: #{tpu_custom_call.1} parent=51 // pred_fallthru
          _
        // Predicated region
        $region69: #{tpu_custom_call.1} parent=51 // pred_check
          %p407 = pneg %p173
        $region70: #{tpu_custom_call.1} parent=51 // pred_check_branch
          %409 = sbr.rel (%p407) target = $region72
        $region71: #{tpu_custom_call.1} parent=51 // pred_region
          %410 = dma.done [#allocation11], 2048
        $region72: #{tpu_custom_call.1} parent=51 // pred_fallthru
          _
        // Predicated region
        $region73: #{tpu_custom_call.1} parent=51 // pred_check
          %p411 = pneg %p194
        $region74: #{tpu_custom_call.1} parent=51 // pred_check_branch
          %413 = sbr.rel (%p411) target = $region76
        $region75: #{tpu_custom_call.1} parent=51 // pred_region
          %414 = dma.done [#allocation14], 4096
        $region76: #{tpu_custom_call.1} parent=51 // pred_fallthru
          _
        %s415 = sand.u32 %s43, 1
        %s416 = scalar_lea.sflag [#allocation5], %s415
        %s417 = sand.u32 %s43, 1
        %s418 = smul.addr %s417, 128
        %s419 = scalar_lea.vmem [#allocation4], %s418
        %p420 = pneg %p56
        %p421 = pneg %p53
        %s422 = sand.u32 %s35, 1
        %s423 = scalar_lea.sflag [#allocation8], %s422
        %s424 = sand.u32 %s69, 1
        %s425 = smul.addr %s424, 128
        %s426 = scalar_lea.vmem [#allocation7], %s425
        %p427 = pneg %p82
        %p428 = pneg %p79
        %s429 = sand.u32 %s35, 1
        %s430 = scalar_lea.sflag [#allocation8], %s429
        %s431 = sand.u32 %s97, 1
        %s432 = smul.addr %s431, 64
        %s433 = scalar_lea.vmem [#allocation9], %s432
        %p434 = pneg %p110
        %p435 = pneg %p107
        %p436 = pneg %p131
        %p437 = pneg %p128
        %p438 = pneg %p152
        %p439 = pneg %p149
        %p440 = pneg %p173
        %p441 = pneg %p170
        %p442 = pneg %p194
        %p443 = pneg %p191
        %p444 = pneg %p215
        %p445 = pneg %p212
        %p446 = pneg %p241
        %p447 = pneg %p238
        %s448 = sand.u32 %s228, 1
        %s449 = scalar_lea.sflag [#allocation6], %s448
        %s450 = sand.u32 %s228, 1
        %s451 = smul.addr %s450, 256
        %s452 = scalar_lea.vmem [#allocation15], %s451
        %s453 = smul.u32 32, %s35
        %s454 = smul.u32 32, %s35
        %s455 = sld [smem:[#allocation3 + %s35]]
        %s456 = smul.u32 32, %s35
        %v458 = vld [vmem:[%s389] sm:$0xf]
        %v459 = vld [vmem:[%s389 + $0x4] sm:$0xf]
        %v460 = vld [vmem:[%s389 + $0x8] sm:$0xf]
        %v461 = vld [vmem:[%s389 + $0xc] sm:$0xf]
        %v462 = vld [vmem:[%s389 + $0x10] sm:$0xf]
        %v463 = vld [vmem:[%s389 + $0x14] sm:$0xf]
        %v464 = vld [vmem:[%s389 + $0x18] sm:$0xf]
        %v465 = vld [vmem:[%s389 + $0x1c] sm:$0xf]
        %v466 = vld [vmem:[%s389 + $0x20] sm:$0xf]
        %v467 = vld [vmem:[%s389 + $0x24] sm:$0xf]
        %v468 = vld [vmem:[%s389 + $0x28] sm:$0xf]
        %v469 = vld [vmem:[%s389 + $0x2c] sm:$0xf]
        %v470 = vld [vmem:[%s389 + $0x30] sm:$0xf]
        %v471 = vld [vmem:[%s389 + $0x34] sm:$0xf]
        %v472 = vld [vmem:[%s389 + $0x38] sm:$0xf]
        %v473 = vld [vmem:[%s389 + $0x3c] sm:$0xf]
        %v474 = vld [vmem:[%s389 + $0x40] sm:$0xf]
        %v475 = vld [vmem:[%s389 + $0x44] sm:$0xf]
        %v476 = vld [vmem:[%s389 + $0x48] sm:$0xf]
        %v477 = vld [vmem:[%s389 + $0x4c] sm:$0xf]
        %v478 = vld [vmem:[%s389 + $0x50] sm:$0xf]
        %v479 = vld [vmem:[%s389 + $0x54] sm:$0xf]
        %v480 = vld [vmem:[%s389 + $0x58] sm:$0xf]
        %v481 = vld [vmem:[%s389 + $0x5c] sm:$0xf]
        %v482 = vld [vmem:[%s389 + $0x60] sm:$0xf]
        %v483 = vld [vmem:[%s389 + $0x64] sm:$0xf]
        %v484 = vld [vmem:[%s389 + $0x68] sm:$0xf]
        %v485 = vld [vmem:[%s389 + $0x6c] sm:$0xf]
        %v486 = vld [vmem:[%s389 + $0x70] sm:$0xf]
        %v487 = vld [vmem:[%s389 + $0x74] sm:$0xf]
        %v488 = vld [vmem:[%s389 + $0x78] sm:$0xf]
        %v489 = vld [vmem:[%s389 + $0x7c] sm:$0xf]
        %v490 = vld [vmem:[%s398] sm:$0xf]
        %v491 = vld [vmem:[%s398 + $0x4] sm:$0xf]
        %v492 = vld [vmem:[%s398 + $0x8] sm:$0xf]
        %v493 = vld [vmem:[%s398 + $0xc] sm:$0xf]
        %v494 = vld [vmem:[%s398 + $0x10] sm:$0xf]
        %v495 = vld [vmem:[%s398 + $0x14] sm:$0xf]
        %v496 = vld [vmem:[%s398 + $0x18] sm:$0xf]
        %v497 = vld [vmem:[%s398 + $0x1c] sm:$0xf]
        %v498 = vld [vmem:[%s398 + $0x20] sm:$0xf]
        %v499 = vld [vmem:[%s398 + $0x24] sm:$0xf]
        %v500 = vld [vmem:[%s398 + $0x28] sm:$0xf]
        %v501 = vld [vmem:[%s398 + $0x2c] sm:$0xf]
        %v502 = vld [vmem:[%s398 + $0x30] sm:$0xf]
        %v503 = vld [vmem:[%s398 + $0x34] sm:$0xf]
        %v504 = vld [vmem:[%s398 + $0x38] sm:$0xf]
        %v505 = vld [vmem:[%s398 + $0x3c] sm:$0xf]
        %v506 = vld [vmem:[%s380] sm:$0xf]
        %v507 = vld [vmem:[%s380 + $0x4] sm:$0xf]
        %v508 = vld [vmem:[%s380 + $0x8] sm:$0xf]
        %v509 = vld [vmem:[%s380 + $0xc] sm:$0xf]
        %v510 = vld [vmem:[%s380 + $0x10] sm:$0xf]
        %v511 = vld [vmem:[%s380 + $0x14] sm:$0xf]
        %v512 = vld [vmem:[%s380 + $0x18] sm:$0xf]
        %v513 = vld [vmem:[%s380 + $0x1c] sm:$0xf]
        %v514 = vld [vmem:[%s380 + $0x20] sm:$0xf]
        %v515 = vld [vmem:[%s380 + $0x24] sm:$0xf]
        %v516 = vld [vmem:[%s380 + $0x28] sm:$0xf]
        %v517 = vld [vmem:[%s380 + $0x2c] sm:$0xf]
        %v518 = vld [vmem:[%s380 + $0x30] sm:$0xf]
        %v519 = vld [vmem:[%s380 + $0x34] sm:$0xf]
        %v520 = vld [vmem:[%s380 + $0x38] sm:$0xf]
        %v521 = vld [vmem:[%s380 + $0x3c] sm:$0xf]
        %v522 = vld [vmem:[%s380 + $0x40] sm:$0xf]
        %v523 = vld [vmem:[%s380 + $0x44] sm:$0xf]
        %v524 = vld [vmem:[%s380 + $0x48] sm:$0xf]
        %v525 = vld [vmem:[%s380 + $0x4c] sm:$0xf]
        %v526 = vld [vmem:[%s380 + $0x50] sm:$0xf]
        %v527 = vld [vmem:[%s380 + $0x54] sm:$0xf]
        %v528 = vld [vmem:[%s380 + $0x58] sm:$0xf]
        %v529 = vld [vmem:[%s380 + $0x5c] sm:$0xf]
        %v530 = vld [vmem:[%s380 + $0x60] sm:$0xf]
        %v531 = vld [vmem:[%s380 + $0x64] sm:$0xf]
        %v532 = vld [vmem:[%s380 + $0x68] sm:$0xf]
        %v533 = vld [vmem:[%s380 + $0x6c] sm:$0xf]
        %v534 = vld [vmem:[%s380 + $0x70] sm:$0xf]
        %v535 = vld [vmem:[%s380 + $0x74] sm:$0xf]
        %v536 = vld [vmem:[%s380 + $0x78] sm:$0xf]
        %v537 = vld [vmem:[%s380 + $0x7c] sm:$0xf]
        %v538 = vld [vmem:[#allocation10] sm:$0xf]
        %v539 = vld [vmem:[#allocation10 + $0x4] sm:$0xf]
        %v540 = vld [vmem:[#allocation10 + $0x8] sm:$0xf]
        %v541 = vld [vmem:[#allocation10 + $0xc] sm:$0xf]
        %v542 = vld [vmem:[#allocation10 + $0x10] sm:$0xf]
        %v543 = vld [vmem:[#allocation10 + $0x14] sm:$0xf]
        %v544 = vld [vmem:[#allocation10 + $0x18] sm:$0xf]
        %v545 = vld [vmem:[#allocation10 + $0x1c] sm:$0xf]
        %v546 = vld [vmem:[#allocation10 + $0x20] sm:$0xf]
        %v547 = vld [vmem:[#allocation10 + $0x24] sm:$0xf]
        %v548 = vld [vmem:[#allocation10 + $0x28] sm:$0xf]
        %v549 = vld [vmem:[#allocation10 + $0x2c] sm:$0xf]
        %v550 = vld [vmem:[#allocation10 + $0x30] sm:$0xf]
        %v551 = vld [vmem:[#allocation10 + $0x34] sm:$0xf]
        %v552 = vld [vmem:[#allocation10 + $0x38] sm:$0xf]
        %v553 = vld [vmem:[#allocation10 + $0x3c] sm:$0xf]
        %v586 = vunpack.c.l.b16 %v506
        %v587 = vunpack.c.l.b16 %v507
        %v588 = vunpack.c.l.b16 %v508
        %v589 = vunpack.c.l.b16 %v509
        %v590 = vunpack.c.l.b16 %v510
        %v591 = vunpack.c.l.b16 %v511
        %v592 = vunpack.c.l.b16 %v512
        %v593 = vunpack.c.l.b16 %v513
        %v594 = vunpack.c.l.b16 %v514
        %v595 = vunpack.c.l.b16 %v515
        %v596 = vunpack.c.l.b16 %v516
        %v597 = vunpack.c.l.b16 %v517
        %v598 = vunpack.c.l.b16 %v518
        %v599 = vunpack.c.l.b16 %v519
        %v600 = vunpack.c.l.b16 %v520
        %v601 = vunpack.c.l.b16 %v521
        %v602 = vunpack.c.l.b16 %v522
        %v603 = vunpack.c.l.b16 %v523
        %v604 = vunpack.c.l.b16 %v524
        %v605 = vunpack.c.l.b16 %v525
        %v606 = vunpack.c.l.b16 %v526
        %v607 = vunpack.c.l.b16 %v527
        %v608 = vunpack.c.l.b16 %v528
        %v609 = vunpack.c.l.b16 %v529
        %v610 = vunpack.c.l.b16 %v530
        %v611 = vunpack.c.l.b16 %v531
        %v612 = vunpack.c.l.b16 %v532
        %v613 = vunpack.c.l.b16 %v533
        %v614 = vunpack.c.l.b16 %v534
        %v615 = vunpack.c.l.b16 %v535
        %v616 = vunpack.c.l.b16 %v536
        %v617 = vunpack.c.l.b16 %v537
        %v618 = vpack.c.b16 %v587, %v586
        %v619 = vpack.c.b16 %v589, %v588
        %v620 = vpack.c.b16 %v591, %v590
        %v621 = vpack.c.b16 %v593, %v592
        %v622 = vpack.c.b16 %v595, %v594
        %v623 = vpack.c.b16 %v597, %v596
        %v624 = vpack.c.b16 %v599, %v598
        %v625 = vpack.c.b16 %v601, %v600
        %v626 = vpack.c.b16 %v603, %v602
        %v627 = vpack.c.b16 %v605, %v604
        %v628 = vpack.c.b16 %v607, %v606
        %v629 = vpack.c.b16 %v609, %v608
        %v630 = vpack.c.b16 %v611, %v610
        %v631 = vpack.c.b16 %v613, %v612
        %v632 = vpack.c.b16 %v615, %v614
        %v633 = vpack.c.b16 %v617, %v616
        %v666 = vunpack.c.l.b16 %v538
        %v667 = vunpack.c.l.b16 %v539
        %v668 = vunpack.c.l.b16 %v540
        %v669 = vunpack.c.l.b16 %v541
        %v670 = vunpack.c.l.b16 %v542
        %v671 = vunpack.c.l.b16 %v543
        %v672 = vunpack.c.l.b16 %v544
        %v673 = vunpack.c.l.b16 %v545
        %v674 = vunpack.c.l.b16 %v546
        %v675 = vunpack.c.l.b16 %v547
        %v676 = vunpack.c.l.b16 %v548
        %v677 = vunpack.c.l.b16 %v549
        %v678 = vunpack.c.l.b16 %v550
        %v679 = vunpack.c.l.b16 %v551
        %v680 = vunpack.c.l.b16 %v552
        %v681 = vunpack.c.l.b16 %v553
        %v682 = vpack.c.b16 %v667, %v666
        %v683 = vpack.c.b16 %v669, %v668
        %v684 = vpack.c.b16 %v671, %v670
        %v685 = vpack.c.b16 %v673, %v672
        %v686 = vpack.c.b16 %v675, %v674
        %v687 = vpack.c.b16 %v677, %v676
        %v688 = vpack.c.b16 %v679, %v678
        %v689 = vpack.c.b16 %v681, %v680
        %698 = vmatprep.subr.bf16.mxu0 0
        %699 = vmatpush1.bf16.msra.mxu0 %v689
        %700 = vmatprep.subr.bf16.mxu0 0
        %701 = vmatpush1.bf16.msra.mxu0 %v688
        %702 = vmatprep.subr.bf16.mxu0 0
        %703 = vmatpush1.bf16.msra.mxu0 %v687
        %704 = vmatprep.subr.bf16.mxu0 0
        %705 = vmatpush1.bf16.msra.mxu0 %v686
        %706 = vmatprep.subr.bf16.mxu0 0
        %707 = vmatpush1.bf16.msra.mxu0 %v685
        %708 = vmatprep.subr.bf16.mxu0 0
        %709 = vmatpush1.bf16.msra.mxu0 %v684
        %710 = vmatprep.subr.bf16.mxu0 0
        %711 = vmatpush1.bf16.msra.mxu0 %v683
        %712 = vmatprep.subr.bf16.mxu0 0
        %713 = vmatpush1.bf16.msra.mxu0 %v682
        %714 = vmatprep.subr.bf16.mxu0 0
        %715 = vmatpush2.bf16.msra.mxu0 0
        %716 = vmatprep.subr.bf16.mxu0 0
        %717 = vmatpush2.bf16.msra.mxu0 0
        %718 = vmatprep.subr.bf16.mxu0 0
        %719 = vmatpush2.bf16.msra.mxu0 0
        %720 = vmatprep.subr.bf16.mxu0 0
        %721 = vmatpush2.bf16.msra.mxu0 0
        %722 = vmatprep.subr.bf16.mxu0 0
        %723 = vmatpush2.bf16.msra.mxu0 0
        %724 = vmatprep.subr.bf16.mxu0 0
        %725 = vmatpush2.bf16.msra.mxu0 0
        %726 = vmatprep.subr.bf16.mxu0 0
        %727 = vmatpush2.bf16.msra.mxu0 0
        %728 = vmatprep.subr.bf16.mxu0 0
        %729 = vmatpush2.bf16.msra.mxu0 0
        %730 = vmatprep.mubr.bf16.mxu0 0
        %731 = vmatmul.mubr.bf16.gmra.mxu0 %v618
        %v732 = vpop.f32.mrf.mxu0
        %v733 = vadd.f32 0.0, %v732
        %v734 = vpop.f32.mrf.mxu0
        %v735 = vpop.f32.mrf.mxu0
        %v736 = vadd.f32 0.0, %v735
        %v737 = vpop.f32.mrf.mxu0
        %738 = vmatprep.mubr.bf16.mxu0 0
        %739 = vmatmul.mubr.bf16.gmra.mxu0 %v619
        %v740 = vpop.f32.mrf.mxu0
        %v741 = vadd.f32 0.0, %v740
        %v742 = vpop.f32.mrf.mxu0
        %v743 = vpop.f32.mrf.mxu0
        %v744 = vadd.f32 0.0, %v743
        %v745 = vpop.f32.mrf.mxu0
        %746 = vmatprep.mubr.bf16.mxu0 0
        %747 = vmatmul.mubr.bf16.gmra.mxu0 %v620
        %v748 = vpop.f32.mrf.mxu0
        %v749 = vadd.f32 0.0, %v748
        %v750 = vpop.f32.mrf.mxu0
        %v751 = vpop.f32.mrf.mxu0
        %v752 = vadd.f32 0.0, %v751
        %v753 = vpop.f32.mrf.mxu0
        %754 = vmatprep.mubr.bf16.mxu0 0
        %755 = vmatmul.mubr.bf16.gmra.mxu0 %v621
        %v756 = vpop.f32.mrf.mxu0
        %v757 = vadd.f32 0.0, %v756
        %v758 = vpop.f32.mrf.mxu0
        %v759 = vpop.f32.mrf.mxu0
        %v760 = vadd.f32 0.0, %v759
        %v761 = vpop.f32.mrf.mxu0
        %762 = vmatprep.mubr.bf16.mxu0 0
        %763 = vmatmul.mubr.bf16.gmra.mxu0 %v622
        %v764 = vpop.f32.mrf.mxu0
        %v765 = vadd.f32 0.0, %v764
        %v766 = vpop.f32.mrf.mxu0
        %v767 = vpop.f32.mrf.mxu0
        %v768 = vadd.f32 0.0, %v767
        %v769 = vpop.f32.mrf.mxu0
        %770 = vmatprep.mubr.bf16.mxu0 0
        %771 = vmatmul.mubr.bf16.gmra.mxu0 %v623
        %v772 = vpop.f32.mrf.mxu0
        %v773 = vadd.f32 0.0, %v772
        %v774 = vpop.f32.mrf.mxu0
        %v775 = vpop.f32.mrf.mxu0
        %v776 = vadd.f32 0.0, %v775
        %v777 = vpop.f32.mrf.mxu0
        %778 = vmatprep.mubr.bf16.mxu0 0
        %779 = vmatmul.mubr.bf16.gmra.mxu0 %v624
        %v780 = vpop.f32.mrf.mxu0
        %v781 = vadd.f32 0.0, %v780
        %v782 = vpop.f32.mrf.mxu0
        %v783 = vpop.f32.mrf.mxu0
        %v784 = vadd.f32 0.0, %v783
        %v785 = vpop.f32.mrf.mxu0
        %786 = vmatprep.mubr.bf16.mxu0 0
        %787 = vmatmul.mubr.bf16.gmra.mxu0 %v625
        %v788 = vpop.f32.mrf.mxu0
        %v789 = vadd.f32 0.0, %v788
        %v790 = vpop.f32.mrf.mxu0
        %v791 = vpop.f32.mrf.mxu0
        %v792 = vadd.f32 0.0, %v791
        %v793 = vpop.f32.mrf.mxu0
        %794 = vmatprep.mubr.bf16.mxu0 0
        %795 = vmatmul.mubr.bf16.gmra.mxu0 %v626
        %v796 = vpop.f32.mrf.mxu0
        %v797 = vadd.f32 0.0, %v796
        %v798 = vpop.f32.mrf.mxu0
        %v799 = vpop.f32.mrf.mxu0
        %v800 = vadd.f32 0.0, %v799
        %v801 = vpop.f32.mrf.mxu0
        %802 = vmatprep.mubr.bf16.mxu0 0
        %803 = vmatmul.mubr.bf16.gmra.mxu0 %v627
        %v804 = vpop.f32.mrf.mxu0
        %v805 = vadd.f32 0.0, %v804
        %v806 = vpop.f32.mrf.mxu0
        %v807 = vpop.f32.mrf.mxu0
        %v808 = vadd.f32 0.0, %v807
        %v809 = vpop.f32.mrf.mxu0
        %810 = vmatprep.mubr.bf16.mxu0 0
        %811 = vmatmul.mubr.bf16.gmra.mxu0 %v628
        %v812 = vpop.f32.mrf.mxu0
        %v813 = vadd.f32 0.0, %v812
        %v814 = vpop.f32.mrf.mxu0
        %v815 = vpop.f32.mrf.mxu0
        %v816 = vadd.f32 0.0, %v815
        %v817 = vpop.f32.mrf.mxu0
        %818 = vmatprep.mubr.bf16.mxu0 0
        %819 = vmatmul.mubr.bf16.gmra.mxu0 %v629
        %v820 = vpop.f32.mrf.mxu0
        %v821 = vadd.f32 0.0, %v820
        %v822 = vpop.f32.mrf.mxu0
        %v823 = vpop.f32.mrf.mxu0
        %v824 = vadd.f32 0.0, %v823
        %v825 = vpop.f32.mrf.mxu0
        %826 = vmatprep.mubr.bf16.mxu0 0
        %827 = vmatmul.mubr.bf16.gmra.mxu0 %v630
        %v828 = vpop.f32.mrf.mxu0
        %v829 = vadd.f32 0.0, %v828
        %v830 = vpop.f32.mrf.mxu0
        %v831 = vpop.f32.mrf.mxu0
        %v832 = vadd.f32 0.0, %v831
        %v833 = vpop.f32.mrf.mxu0
        %834 = vmatprep.mubr.bf16.mxu0 0
        %835 = vmatmul.mubr.bf16.gmra.mxu0 %v631
        %v836 = vpop.f32.mrf.mxu0
        %v837 = vadd.f32 0.0, %v836
        %v838 = vpop.f32.mrf.mxu0
        %v839 = vpop.f32.mrf.mxu0
        %v840 = vadd.f32 0.0, %v839
        %v841 = vpop.f32.mrf.mxu0
        %842 = vmatprep.mubr.bf16.mxu0 0
        %843 = vmatmul.mubr.bf16.gmra.mxu0 %v632
        %v844 = vpop.f32.mrf.mxu0
        %v845 = vadd.f32 0.0, %v844
        %v846 = vpop.f32.mrf.mxu0
        %v847 = vpop.f32.mrf.mxu0
        %v848 = vadd.f32 0.0, %v847
        %v849 = vpop.f32.mrf.mxu0
        %850 = vmatprep.mubr.bf16.mxu0 0
        %851 = vmatmul.mubr.bf16.gmra.mxu0 %v633
        %v852 = vpop.f32.mrf.mxu0
        %v853 = vadd.f32 0.0, %v852
        %v854 = vpop.f32.mrf.mxu0
        %v855 = vpop.f32.mrf.mxu0
        %v856 = vadd.f32 0.0, %v855
        %v857 = vpop.f32.mrf.mxu0
        %858 = vdwg.mxu0
        %v891 = vunpack.c.l.b16 %v458
        %v892 = vunpack.c.l.b16 %v459
        %v893 = vunpack.c.l.b16 %v460
        %v894 = vunpack.c.l.b16 %v461
        %v895 = vunpack.c.l.b16 %v462
        %v896 = vunpack.c.l.b16 %v463
        %v897 = vunpack.c.l.b16 %v464
        %v898 = vunpack.c.l.b16 %v465
        %v899 = vunpack.c.l.b16 %v466
        %v900 = vunpack.c.l.b16 %v467
        %v901 = vunpack.c.l.b16 %v468
        %v902 = vunpack.c.l.b16 %v469
        %v903 = vunpack.c.l.b16 %v470
        %v904 = vunpack.c.l.b16 %v471
        %v905 = vunpack.c.l.b16 %v472
        %v906 = vunpack.c.l.b16 %v473
        %v907 = vunpack.c.l.b16 %v474
        %v908 = vunpack.c.l.b16 %v475
        %v909 = vunpack.c.l.b16 %v476
        %v910 = vunpack.c.l.b16 %v477
        %v911 = vunpack.c.l.b16 %v478
        %v912 = vunpack.c.l.b16 %v479
        %v913 = vunpack.c.l.b16 %v480
        %v914 = vunpack.c.l.b16 %v481
        %v915 = vunpack.c.l.b16 %v482
        %v916 = vunpack.c.l.b16 %v483
        %v917 = vunpack.c.l.b16 %v484
        %v918 = vunpack.c.l.b16 %v485
        %v919 = vunpack.c.l.b16 %v486
        %v920 = vunpack.c.l.b16 %v487
        %v921 = vunpack.c.l.b16 %v488
        %v922 = vunpack.c.l.b16 %v489
        %v923 = vpack.c.b16 %v892, %v891
        %v924 = vpack.c.b16 %v894, %v893
        %v925 = vpack.c.b16 %v896, %v895
        %v926 = vpack.c.b16 %v898, %v897
        %v927 = vpack.c.b16 %v900, %v899
        %v928 = vpack.c.b16 %v902, %v901
        %v929 = vpack.c.b16 %v904, %v903
        %v930 = vpack.c.b16 %v906, %v905
        %v931 = vpack.c.b16 %v908, %v907
        %v932 = vpack.c.b16 %v910, %v909
        %v933 = vpack.c.b16 %v912, %v911
        %v934 = vpack.c.b16 %v914, %v913
        %v935 = vpack.c.b16 %v916, %v915
        %v936 = vpack.c.b16 %v918, %v917
        %v937 = vpack.c.b16 %v920, %v919
        %v938 = vpack.c.b16 %v922, %v921
        %v971 = vunpack.c.l.b16 %v490
        %v972 = vunpack.c.l.b16 %v491
        %v973 = vunpack.c.l.b16 %v492
        %v974 = vunpack.c.l.b16 %v493
        %v975 = vunpack.c.l.b16 %v494
        %v976 = vunpack.c.l.b16 %v495
        %v977 = vunpack.c.l.b16 %v496
        %v978 = vunpack.c.l.b16 %v497
        %v979 = vunpack.c.l.b16 %v498
        %v980 = vunpack.c.l.b16 %v499
        %v981 = vunpack.c.l.b16 %v500
        %v982 = vunpack.c.l.b16 %v501
        %v983 = vunpack.c.l.b16 %v502
        %v984 = vunpack.c.l.b16 %v503
        %v985 = vunpack.c.l.b16 %v504
        %v986 = vunpack.c.l.b16 %v505
        %v987 = vpack.c.b16 %v972, %v971
        %v988 = vpack.c.b16 %v974, %v973
        %v989 = vpack.c.b16 %v976, %v975
        %v990 = vpack.c.b16 %v978, %v977
        %v991 = vpack.c.b16 %v980, %v979
        %v992 = vpack.c.b16 %v982, %v981
        %v993 = vpack.c.b16 %v984, %v983
        %v994 = vpack.c.b16 %v986, %v985
        %1003 = vmatprep.subr.bf16.mxu0 0
        %1004 = vmatpush1.bf16.msra.mxu0 %v994
        %1005 = vmatprep.subr.bf16.mxu0 0
        %1006 = vmatpush1.bf16.msra.mxu0 %v993
        %1007 = vmatprep.subr.bf16.mxu0 0
        %1008 = vmatpush1.bf16.msra.mxu0 %v992
        %1009 = vmatprep.subr.bf16.mxu0 0
        %1010 = vmatpush1.bf16.msra.mxu0 %v991
        %1011 = vmatprep.subr.bf16.mxu0 0
        %1012 = vmatpush1.bf16.msra.mxu0 %v990
        %1013 = vmatprep.subr.bf16.mxu0 0
        %1014 = vmatpush1.bf16.msra.mxu0 %v989
        %1015 = vmatprep.subr.bf16.mxu0 0
        %1016 = vmatpush1.bf16.msra.mxu0 %v988
        %1017 = vmatprep.subr.bf16.mxu0 0
        %1018 = vmatpush1.bf16.msra.mxu0 %v987
        %1019 = vmatprep.subr.bf16.mxu0 0
        %1020 = vmatpush2.bf16.msra.mxu0 0
        %1021 = vmatprep.subr.bf16.mxu0 0
        %1022 = vmatpush2.bf16.msra.mxu0 0
        %1023 = vmatprep.subr.bf16.mxu0 0
        %1024 = vmatpush2.bf16.msra.mxu0 0
        %1025 = vmatprep.subr.bf16.mxu0 0
        %1026 = vmatpush2.bf16.msra.mxu0 0
        %1027 = vmatprep.subr.bf16.mxu0 0
        %1028 = vmatpush2.bf16.msra.mxu0 0
        %1029 = vmatprep.subr.bf16.mxu0 0
        %1030 = vmatpush2.bf16.msra.mxu0 0
        %1031 = vmatprep.subr.bf16.mxu0 0
        %1032 = vmatpush2.bf16.msra.mxu0 0
        %1033 = vmatprep.subr.bf16.mxu0 0
        %1034 = vmatpush2.bf16.msra.mxu0 0
        %1035 = vmatprep.mubr.bf16.mxu0 0
        %1036 = vmatmul.mubr.bf16.gmra.mxu0 %v923
        %v1037 = vpop.f32.mrf.mxu0
        %v1038 = vadd.f32 %v733, %v1037
        %v1039 = vpop.f32.mrf.mxu0
        %v1040 = vpop.f32.mrf.mxu0
        %v1041 = vadd.f32 %v736, %v1040
        %v1042 = vpop.f32.mrf.mxu0
        %1043 = vmatprep.mubr.bf16.mxu0 0
        %1044 = vmatmul.mubr.bf16.gmra.mxu0 %v924
        %v1045 = vpop.f32.mrf.mxu0
        %v1046 = vadd.f32 %v741, %v1045
        %v1047 = vpop.f32.mrf.mxu0
        %v1048 = vpop.f32.mrf.mxu0
        %v1049 = vadd.f32 %v744, %v1048
        %v1050 = vpop.f32.mrf.mxu0
        %1051 = vmatprep.mubr.bf16.mxu0 0
        %1052 = vmatmul.mubr.bf16.gmra.mxu0 %v925
        %v1053 = vpop.f32.mrf.mxu0
        %v1054 = vadd.f32 %v749, %v1053
        %v1055 = vpop.f32.mrf.mxu0
        %v1056 = vpop.f32.mrf.mxu0
        %v1057 = vadd.f32 %v752, %v1056
        %v1058 = vpop.f32.mrf.mxu0
        %1059 = vmatprep.mubr.bf16.mxu0 0
        %1060 = vmatmul.mubr.bf16.gmra.mxu0 %v926
        %v1061 = vpop.f32.mrf.mxu0
        %v1062 = vadd.f32 %v757, %v1061
        %v1063 = vpop.f32.mrf.mxu0
        %v1064 = vpop.f32.mrf.mxu0
        %v1065 = vadd.f32 %v760, %v1064
        %v1066 = vpop.f32.mrf.mxu0
        %1067 = vmatprep.mubr.bf16.mxu0 0
        %1068 = vmatmul.mubr.bf16.gmra.mxu0 %v927
        %v1069 = vpop.f32.mrf.mxu0
        %v1070 = vadd.f32 %v765, %v1069
        %v1071 = vpop.f32.mrf.mxu0
        %v1072 = vpop.f32.mrf.mxu0
        %v1073 = vadd.f32 %v768, %v1072
        %v1074 = vpop.f32.mrf.mxu0
        %1075 = vmatprep.mubr.bf16.mxu0 0
        %1076 = vmatmul.mubr.bf16.gmra.mxu0 %v928
        %v1077 = vpop.f32.mrf.mxu0
        %v1078 = vadd.f32 %v773, %v1077
        %v1079 = vpop.f32.mrf.mxu0
        %v1080 = vpop.f32.mrf.mxu0
        %v1081 = vadd.f32 %v776, %v1080
        %v1082 = vpop.f32.mrf.mxu0
        %1083 = vmatprep.mubr.bf16.mxu0 0
        %1084 = vmatmul.mubr.bf16.gmra.mxu0 %v929
        %v1085 = vpop.f32.mrf.mxu0
        %v1086 = vadd.f32 %v781, %v1085
        %v1087 = vpop.f32.mrf.mxu0
        %v1088 = vpop.f32.mrf.mxu0
        %v1089 = vadd.f32 %v784, %v1088
        %v1090 = vpop.f32.mrf.mxu0
        %1091 = vmatprep.mubr.bf16.mxu0 0
        %1092 = vmatmul.mubr.bf16.gmra.mxu0 %v930
        %v1093 = vpop.f32.mrf.mxu0
        %v1094 = vadd.f32 %v789, %v1093
        %v1095 = vpop.f32.mrf.mxu0
        %v1096 = vpop.f32.mrf.mxu0
        %v1097 = vadd.f32 %v792, %v1096
        %v1098 = vpop.f32.mrf.mxu0
        %1099 = vmatprep.mubr.bf16.mxu0 0
        %1100 = vmatmul.mubr.bf16.gmra.mxu0 %v931
        %v1101 = vpop.f32.mrf.mxu0
        %v1102 = vadd.f32 %v797, %v1101
        %v1103 = vpop.f32.mrf.mxu0
        %v1104 = vpop.f32.mrf.mxu0
        %v1105 = vadd.f32 %v800, %v1104
        %v1106 = vpop.f32.mrf.mxu0
        %1107 = vmatprep.mubr.bf16.mxu0 0
        %1108 = vmatmul.mubr.bf16.gmra.mxu0 %v932
        %v1109 = vpop.f32.mrf.mxu0
        %v1110 = vadd.f32 %v805, %v1109
        %v1111 = vpop.f32.mrf.mxu0
        %v1112 = vpop.f32.mrf.mxu0
        %v1113 = vadd.f32 %v808, %v1112
        %v1114 = vpop.f32.mrf.mxu0
        %1115 = vmatprep.mubr.bf16.mxu0 0
        %1116 = vmatmul.mubr.bf16.gmra.mxu0 %v933
        %v1117 = vpop.f32.mrf.mxu0
        %v1118 = vadd.f32 %v813, %v1117
        %v1119 = vpop.f32.mrf.mxu0
        %v1120 = vpop.f32.mrf.mxu0
        %v1121 = vadd.f32 %v816, %v1120
        %v1122 = vpop.f32.mrf.mxu0
        %1123 = vmatprep.mubr.bf16.mxu0 0
        %1124 = vmatmul.mubr.bf16.gmra.mxu0 %v934
        %v1125 = vpop.f32.mrf.mxu0
        %v1126 = vadd.f32 %v821, %v1125
        %v1127 = vpop.f32.mrf.mxu0
        %v1128 = vpop.f32.mrf.mxu0
        %v1129 = vadd.f32 %v824, %v1128
        %v1130 = vpop.f32.mrf.mxu0
        %1131 = vmatprep.mubr.bf16.mxu0 0
        %1132 = vmatmul.mubr.bf16.gmra.mxu0 %v935
        %v1133 = vpop.f32.mrf.mxu0
        %v1134 = vadd.f32 %v829, %v1133
        %v1135 = vpop.f32.mrf.mxu0
        %v1136 = vpop.f32.mrf.mxu0
        %v1137 = vadd.f32 %v832, %v1136
        %v1138 = vpop.f32.mrf.mxu0
        %1139 = vmatprep.mubr.bf16.mxu0 0
        %1140 = vmatmul.mubr.bf16.gmra.mxu0 %v936
        %v1141 = vpop.f32.mrf.mxu0
        %v1142 = vadd.f32 %v837, %v1141
        %v1143 = vpop.f32.mrf.mxu0
        %v1144 = vpop.f32.mrf.mxu0
        %v1145 = vadd.f32 %v840, %v1144
        %v1146 = vpop.f32.mrf.mxu0
        %1147 = vmatprep.mubr.bf16.mxu0 0
        %1148 = vmatmul.mubr.bf16.gmra.mxu0 %v937
        %v1149 = vpop.f32.mrf.mxu0
        %v1150 = vadd.f32 %v845, %v1149
        %v1151 = vpop.f32.mrf.mxu0
        %v1152 = vpop.f32.mrf.mxu0
        %v1153 = vadd.f32 %v848, %v1152
        %v1154 = vpop.f32.mrf.mxu0
        %1155 = vmatprep.mubr.bf16.mxu0 0
        %1156 = vmatmul.mubr.bf16.gmra.mxu0 %v938
        %v1157 = vpop.f32.mrf.mxu0
        %v1158 = vadd.f32 %v853, %v1157
        %v1159 = vpop.f32.mrf.mxu0
        %v1160 = vpop.f32.mrf.mxu0
        %v1161 = vadd.f32 %v856, %v1160
        %v1162 = vpop.f32.mrf.mxu0
        %1163 = vdwg.mxu0
        %v1164 = vld [vmem:[%s5] sm:$0x1]
        %v1166 = vlaneseq
        %v1167 = vshrl.u32 %v1166, 7
        %v1168 = vsub.s32 0, %v1167
        %v1169 = vrot.slane %v1164, %v1168
        %v1171 = vadd.f32 %v1038, %v1169
        %v1172 = vadd.f32 %v1041, %v1169
        %v1173 = vadd.f32 %v1046, %v1169
        %v1174 = vadd.f32 %v1049, %v1169
        %v1175 = vadd.f32 %v1054, %v1169
        %v1176 = vadd.f32 %v1057, %v1169
        %v1177 = vadd.f32 %v1062, %v1169
        %v1178 = vadd.f32 %v1065, %v1169
        %v1179 = vadd.f32 %v1070, %v1169
        %v1180 = vadd.f32 %v1073, %v1169
        %v1181 = vadd.f32 %v1078, %v1169
        %v1182 = vadd.f32 %v1081, %v1169
        %v1183 = vadd.f32 %v1086, %v1169
        %v1184 = vadd.f32 %v1089, %v1169
        %v1185 = vadd.f32 %v1094, %v1169
        %v1186 = vadd.f32 %v1097, %v1169
        %v1187 = vadd.f32 %v1102, %v1169
        %v1188 = vadd.f32 %v1105, %v1169
        %v1189 = vadd.f32 %v1110, %v1169
        %v1190 = vadd.f32 %v1113, %v1169
        %v1191 = vadd.f32 %v1118, %v1169
        %v1192 = vadd.f32 %v1121, %v1169
        %v1193 = vadd.f32 %v1126, %v1169
        %v1194 = vadd.f32 %v1129, %v1169
        %v1195 = vadd.f32 %v1134, %v1169
        %v1196 = vadd.f32 %v1137, %v1169
        %v1197 = vadd.f32 %v1142, %v1169
        %v1198 = vadd.f32 %v1145, %v1169
        %v1199 = vadd.f32 %v1150, %v1169
        %v1200 = vadd.f32 %v1153, %v1169
        %v1201 = vadd.f32 %v1158, %v1169
        %v1202 = vadd.f32 %v1161, %v1169
        %v1203 = vtanh.pop %v1171
        %v1204 = vtanh.pop %v1172
        %v1205 = vtanh.pop %v1173
        %v1206 = vtanh.pop %v1174
        %v1207 = vtanh.pop %v1175
        %v1208 = vtanh.pop %v1176
        %v1209 = vtanh.pop %v1177
        %v1210 = vtanh.pop %v1178
        %v1211 = vtanh.pop %v1179
        %v1212 = vtanh.pop %v1180
        %v1213 = vtanh.pop %v1181
        %v1214 = vtanh.pop %v1182
        %v1215 = vtanh.pop %v1183
        %v1216 = vtanh.pop %v1184
        %v1217 = vtanh.pop %v1185
        %v1218 = vtanh.pop %v1186
        %v1219 = vtanh.pop %v1187
        %v1220 = vtanh.pop %v1188
        %v1221 = vtanh.pop %v1189
        %v1222 = vtanh.pop %v1190
        %v1223 = vtanh.pop %v1191
        %v1224 = vtanh.pop %v1192
        %v1225 = vtanh.pop %v1193
        %v1226 = vtanh.pop %v1194
        %v1227 = vtanh.pop %v1195
        %v1228 = vtanh.pop %v1196
        %v1229 = vtanh.pop %v1197
        %v1230 = vtanh.pop %v1198
        %v1231 = vtanh.pop %v1199
        %v1232 = vtanh.pop %v1200
        %v1233 = vtanh.pop %v1201
        %v1234 = vtanh.pop %v1202
        %v1235 = vtanh.pop %v1203
        %v1236 = vtanh.pop %v1204
        %v1237 = vtanh.pop %v1205
        %v1238 = vtanh.pop %v1206
        %v1239 = vtanh.pop %v1207
        %v1240 = vtanh.pop %v1208
        %v1241 = vtanh.pop %v1209
        %v1242 = vtanh.pop %v1210
        %v1243 = vtanh.pop %v1211
        %v1244 = vtanh.pop %v1212
        %v1245 = vtanh.pop %v1213
        %v1246 = vtanh.pop %v1214
        %v1247 = vtanh.pop %v1215
        %v1248 = vtanh.pop %v1216
        %v1249 = vtanh.pop %v1217
        %v1250 = vtanh.pop %v1218
        %v1251 = vtanh.pop %v1219
        %v1252 = vtanh.pop %v1220
        %v1253 = vtanh.pop %v1221
        %v1254 = vtanh.pop %v1222
        %v1255 = vtanh.pop %v1223
        %v1256 = vtanh.pop %v1224
        %v1257 = vtanh.pop %v1225
        %v1258 = vtanh.pop %v1226
        %v1259 = vtanh.pop %v1227
        %v1260 = vtanh.pop %v1228
        %v1261 = vtanh.pop %v1229
        %v1262 = vtanh.pop %v1230
        %v1263 = vtanh.pop %v1231
        %v1264 = vtanh.pop %v1232
        %v1265 = vtanh.pop %v1233
        %v1266 = vtanh.pop %v1234
        %v1267 = vpack.c.bf16 %v1204, %v1203
        %v1268 = vpack.c.bf16 %v1206, %v1205
        %v1269 = vpack.c.bf16 %v1208, %v1207
        %v1270 = vpack.c.bf16 %v1210, %v1209
        %v1271 = vpack.c.bf16 %v1212, %v1211
        %v1272 = vpack.c.bf16 %v1214, %v1213
        %v1273 = vpack.c.bf16 %v1216, %v1215
        %v1274 = vpack.c.bf16 %v1218, %v1217
        %v1275 = vpack.c.bf16 %v1220, %v1219
        %v1276 = vpack.c.bf16 %v1222, %v1221
        %v1277 = vpack.c.bf16 %v1224, %v1223
        %v1278 = vpack.c.bf16 %v1226, %v1225
        %v1279 = vpack.c.bf16 %v1228, %v1227
        %v1280 = vpack.c.bf16 %v1230, %v1229
        %v1281 = vpack.c.bf16 %v1232, %v1231
        %v1282 = vpack.c.bf16 %v1234, %v1233
        %v1283 = vld [vmem:[#allocation12] sm:$0xff]
        %v1284 = vld [vmem:[#allocation12 + $0x8] sm:$0xff]
        %v1285 = vld [vmem:[#allocation12 + $0x10] sm:$0xff]
        %v1286 = vld [vmem:[#allocation12 + $0x18] sm:$0xff]
        %v1287 = vld [vmem:[#allocation12 + $0x20] sm:$0xff]
        %v1288 = vld [vmem:[#allocation12 + $0x28] sm:$0xff]
        %v1289 = vld [vmem:[#allocation12 + $0x30] sm:$0xff]
        %v1290 = vld [vmem:[#allocation12 + $0x38] sm:$0xff]
        %v1291 = vld [vmem:[#allocation12 + $0x40] sm:$0xff]
        %v1292 = vld [vmem:[#allocation12 + $0x48] sm:$0xff]
        %v1293 = vld [vmem:[#allocation12 + $0x50] sm:$0xff]
        %v1294 = vld [vmem:[#allocation12 + $0x58] sm:$0xff]
        %v1295 = vld [vmem:[#allocation12 + $0x60] sm:$0xff]
        %v1296 = vld [vmem:[#allocation12 + $0x68] sm:$0xff]
        %v1297 = vld [vmem:[#allocation12 + $0x70] sm:$0xff]
        %v1298 = vld [vmem:[#allocation12 + $0x78] sm:$0xff]
        %1315 = vrot.lane.b32.xlu0 %v1267, 64
        %v1316 = vpop.permute.xlu0 %1315
        %1317 = vrot.lane.b32.xlu0 %v1268, 64
        %v1318 = vpop.permute.xlu0 %1317
        %1319 = vrot.lane.b32.xlu0 %v1269, 64
        %v1320 = vpop.permute.xlu0 %1319
        %1321 = vrot.lane.b32.xlu0 %v1270, 64
        %v1322 = vpop.permute.xlu0 %1321
        %1323 = vrot.lane.b32.xlu0 %v1271, 64
        %v1324 = vpop.permute.xlu0 %1323
        %1325 = vrot.lane.b32.xlu0 %v1272, 64
        %v1326 = vpop.permute.xlu0 %1325
        %1327 = vrot.lane.b32.xlu0 %v1273, 64
        %v1328 = vpop.permute.xlu0 %1327
        %1329 = vrot.lane.b32.xlu0 %v1274, 64
        %v1330 = vpop.permute.xlu0 %1329
        %1331 = vrot.lane.b32.xlu0 %v1275, 64
        %v1332 = vpop.permute.xlu0 %1331
        %1333 = vrot.lane.b32.xlu0 %v1276, 64
        %v1334 = vpop.permute.xlu0 %1333
        %1335 = vrot.lane.b32.xlu0 %v1277, 64
        %v1336 = vpop.permute.xlu0 %1335
        %1337 = vrot.lane.b32.xlu0 %v1278, 64
        %v1338 = vpop.permute.xlu0 %1337
        %1339 = vrot.lane.b32.xlu0 %v1279, 64
        %v1340 = vpop.permute.xlu0 %1339
        %1341 = vrot.lane.b32.xlu0 %v1280, 64
        %v1342 = vpop.permute.xlu0 %1341
        %1343 = vrot.lane.b32.xlu0 %v1281, 64
        %v1344 = vpop.permute.xlu0 %1343
        %1345 = vrot.lane.b32.xlu0 %v1282, 64
        %v1346 = vpop.permute.xlu0 %1345
        %v1363 = vunpack.c.l.b16 %v1283
        %v1364 = vunpack.c.h.b16 %v1283
        %v1365 = vunpack.c.l.b16 %v1284
        %v1366 = vunpack.c.h.b16 %v1284
        %v1367 = vunpack.c.l.b16 %v1285
        %v1368 = vunpack.c.h.b16 %v1285
        %v1369 = vunpack.c.l.b16 %v1286
        %v1370 = vunpack.c.h.b16 %v1286
        %v1371 = vunpack.c.l.b16 %v1287
        %v1372 = vunpack.c.h.b16 %v1287
        %v1373 = vunpack.c.l.b16 %v1288
        %v1374 = vunpack.c.h.b16 %v1288
        %v1375 = vunpack.c.l.b16 %v1289
        %v1376 = vunpack.c.h.b16 %v1289
        %v1377 = vunpack.c.l.b16 %v1290
        %v1378 = vunpack.c.h.b16 %v1290
        %v1379 = vunpack.c.l.b16 %v1291
        %v1380 = vunpack.c.h.b16 %v1291
        %v1381 = vunpack.c.l.b16 %v1292
        %v1382 = vunpack.c.h.b16 %v1292
        %v1383 = vunpack.c.l.b16 %v1293
        %v1384 = vunpack.c.h.b16 %v1293
        %v1385 = vunpack.c.l.b16 %v1294
        %v1386 = vunpack.c.h.b16 %v1294
        %v1387 = vunpack.c.l.b16 %v1295
        %v1388 = vunpack.c.h.b16 %v1295
        %v1389 = vunpack.c.l.b16 %v1296
        %v1390 = vunpack.c.h.b16 %v1296
        %v1391 = vunpack.c.l.b16 %v1297
        %v1392 = vunpack.c.h.b16 %v1297
        %v1393 = vunpack.c.l.b16 %v1298
        %v1394 = vunpack.c.h.b16 %v1298
        %v1395 = vpack.c.b16 %v1367, %v1363
        %v1396 = vpack.c.b16 %v1368, %v1364
        %v1397 = vpack.c.b16 %v1369, %v1365
        %v1398 = vpack.c.b16 %v1370, %v1366
        %v1399 = vpack.c.b16 %v1375, %v1371
        %v1400 = vpack.c.b16 %v1376, %v1372
        %v1401 = vpack.c.b16 %v1377, %v1373
        %v1402 = vpack.c.b16 %v1378, %v1374
        %v1403 = vpack.c.b16 %v1383, %v1379
        %v1404 = vpack.c.b16 %v1384, %v1380
        %v1405 = vpack.c.b16 %v1385, %v1381
        %v1406 = vpack.c.b16 %v1386, %v1382
        %v1407 = vpack.c.b16 %v1391, %v1387
        %v1408 = vpack.c.b16 %v1392, %v1388
        %v1409 = vpack.c.b16 %v1393, %v1389
        %v1410 = vpack.c.b16 %v1394, %v1390
        %vm1427 = vcmask 523264
        %v1429 = vsel %vm1427, %v1316, 0
        %v1432 = vsel %vm1427, %v1318, 0
        %v1435 = vsel %vm1427, %v1320, 0
        %v1438 = vsel %vm1427, %v1322, 0
        %v1441 = vsel %vm1427, %v1324, 0
        %v1444 = vsel %vm1427, %v1326, 0
        %v1447 = vsel %vm1427, %v1328, 0
        %v1450 = vsel %vm1427, %v1330, 0
        %v1453 = vsel %vm1427, %v1332, 0
        %v1456 = vsel %vm1427, %v1334, 0
        %v1459 = vsel %vm1427, %v1336, 0
        %v1462 = vsel %vm1427, %v1338, 0
        %v1465 = vsel %vm1427, %v1340, 0
        %v1468 = vsel %vm1427, %v1342, 0
        %v1471 = vsel %vm1427, %v1344, 0
        %v1474 = vsel %vm1427, %v1346, 0
        %1476 = vmatprep.subr.bf16.mxu0 0
        %1477 = vmatpush1.bf16.msra.mxu0 0
        %1478 = vmatprep.subr.bf16.mxu0 0
        %1479 = vmatpush1.bf16.msra.mxu0 0
        %1480 = vmatprep.subr.bf16.mxu0 0
        %1481 = vmatpush1.bf16.msra.mxu0 0
        %1482 = vmatprep.subr.bf16.mxu0 0
        %1483 = vmatpush1.bf16.msra.mxu0 0
        %1484 = vmatprep.subr.bf16.mxu0 %v1408
        %1485 = vmatpush1.bf16.msra.mxu0 %v1407
        %1486 = vmatprep.subr.bf16.mxu0 %v1404
        %1487 = vmatpush1.bf16.msra.mxu0 %v1403
        %1488 = vmatprep.subr.bf16.mxu0 %v1400
        %1489 = vmatpush1.bf16.msra.mxu0 %v1399
        %1490 = vmatprep.subr.bf16.mxu0 %v1396
        %1491 = vmatpush1.bf16.msra.mxu0 %v1395
        %1492 = vmatprep.subr.bf16.mxu0 0
        %1493 = vmatpush2.bf16.msra.mxu0 0
        %1494 = vmatprep.subr.bf16.mxu0 0
        %1495 = vmatpush2.bf16.msra.mxu0 0
        %1496 = vmatprep.subr.bf16.mxu0 0
        %1497 = vmatpush2.bf16.msra.mxu0 0
        %1498 = vmatprep.subr.bf16.mxu0 0
        %1499 = vmatpush2.bf16.msra.mxu0 0
        %1500 = vmatprep.subr.bf16.mxu0 0
        %1501 = vmatpush2.bf16.msra.mxu0 0
        %1502 = vmatprep.subr.bf16.mxu0 0
        %1503 = vmatpush2.bf16.msra.mxu0 0
        %1504 = vmatprep.subr.bf16.mxu0 0
        %1505 = vmatpush2.bf16.msra.mxu0 0
        %1506 = vmatprep.subr.bf16.mxu0 0
        %1507 = vmatpush2.bf16.msra.mxu0 0
        %1508 = vmatprep.mubr.bf16.mxu0 0
        %1509 = vmatmul.mubr.bf16.gmra.mxu0 %v1429
        %v1510 = vpop.f32.mrf.mxu0
        %v1511 = vadd.f32 0.0, %v1510
        %v1512 = vpop.f32.mrf.mxu0
        %v1513 = vadd.f32 0.0, %v1512
        %v1514 = vpop.f32.mrf.mxu0
        %v1515 = vadd.f32 0.0, %v1514
        %v1516 = vpop.f32.mrf.mxu0
        %v1517 = vadd.f32 0.0, %v1516
        %1518 = vmatprep.mubr.bf16.mxu0 0
        %1519 = vmatmul.mubr.bf16.gmra.mxu0 %v1432
        %v1520 = vpop.f32.mrf.mxu0
        %v1521 = vadd.f32 0.0, %v1520
        %v1522 = vpop.f32.mrf.mxu0
        %v1523 = vadd.f32 0.0, %v1522
        %v1524 = vpop.f32.mrf.mxu0
        %v1525 = vadd.f32 0.0, %v1524
        %v1526 = vpop.f32.mrf.mxu0
        %v1527 = vadd.f32 0.0, %v1526
        %1528 = vmatprep.mubr.bf16.mxu0 0
        %1529 = vmatmul.mubr.bf16.gmra.mxu0 %v1435
        %v1530 = vpop.f32.mrf.mxu0
        %v1531 = vadd.f32 0.0, %v1530
        %v1532 = vpop.f32.mrf.mxu0
        %v1533 = vadd.f32 0.0, %v1532
        %v1534 = vpop.f32.mrf.mxu0
        %v1535 = vadd.f32 0.0, %v1534
        %v1536 = vpop.f32.mrf.mxu0
        %v1537 = vadd.f32 0.0, %v1536
        %1538 = vmatprep.mubr.bf16.mxu0 0
        %1539 = vmatmul.mubr.bf16.gmra.mxu0 %v1438
        %v1540 = vpop.f32.mrf.mxu0
        %v1541 = vadd.f32 0.0, %v1540
        %v1542 = vpop.f32.mrf.mxu0
        %v1543 = vadd.f32 0.0, %v1542
        %v1544 = vpop.f32.mrf.mxu0
        %v1545 = vadd.f32 0.0, %v1544
        %v1546 = vpop.f32.mrf.mxu0
        %v1547 = vadd.f32 0.0, %v1546
        %1548 = vmatprep.mubr.bf16.mxu0 0
        %1549 = vmatmul.mubr.bf16.gmra.mxu0 %v1441
        %v1550 = vpop.f32.mrf.mxu0
        %v1551 = vadd.f32 0.0, %v1550
        %v1552 = vpop.f32.mrf.mxu0
        %v1553 = vadd.f32 0.0, %v1552
        %v1554 = vpop.f32.mrf.mxu0
        %v1555 = vadd.f32 0.0, %v1554
        %v1556 = vpop.f32.mrf.mxu0
        %v1557 = vadd.f32 0.0, %v1556
        %1558 = vmatprep.mubr.bf16.mxu0 0
        %1559 = vmatmul.mubr.bf16.gmra.mxu0 %v1444
        %v1560 = vpop.f32.mrf.mxu0
        %v1561 = vadd.f32 0.0, %v1560
        %v1562 = vpop.f32.mrf.mxu0
        %v1563 = vadd.f32 0.0, %v1562
        %v1564 = vpop.f32.mrf.mxu0
        %v1565 = vadd.f32 0.0, %v1564
        %v1566 = vpop.f32.mrf.mxu0
        %v1567 = vadd.f32 0.0, %v1566
        %1568 = vmatprep.mubr.bf16.mxu0 0
        %1569 = vmatmul.mubr.bf16.gmra.mxu0 %v1447
        %v1570 = vpop.f32.mrf.mxu0
        %v1571 = vadd.f32 0.0, %v1570
        %v1572 = vpop.f32.mrf.mxu0
        %v1573 = vadd.f32 0.0, %v1572
        %v1574 = vpop.f32.mrf.mxu0
        %v1575 = vadd.f32 0.0, %v1574
        %v1576 = vpop.f32.mrf.mxu0
        %v1577 = vadd.f32 0.0, %v1576
        %1578 = vmatprep.mubr.bf16.mxu0 0
        %1579 = vmatmul.mubr.bf16.gmra.mxu0 %v1450
        %v1580 = vpop.f32.mrf.mxu0
        %v1581 = vadd.f32 0.0, %v1580
        %v1582 = vpop.f32.mrf.mxu0
        %v1583 = vadd.f32 0.0, %v1582
        %v1584 = vpop.f32.mrf.mxu0
        %v1585 = vadd.f32 0.0, %v1584
        %v1586 = vpop.f32.mrf.mxu0
        %v1587 = vadd.f32 0.0, %v1586
        %1588 = vmatprep.mubr.bf16.mxu0 0
        %1589 = vmatmul.mubr.bf16.gmra.mxu0 %v1453
        %v1590 = vpop.f32.mrf.mxu0
        %v1591 = vadd.f32 0.0, %v1590
        %v1592 = vpop.f32.mrf.mxu0
        %v1593 = vadd.f32 0.0, %v1592
        %v1594 = vpop.f32.mrf.mxu0
        %v1595 = vadd.f32 0.0, %v1594
        %v1596 = vpop.f32.mrf.mxu0
        %v1597 = vadd.f32 0.0, %v1596
        %1598 = vmatprep.mubr.bf16.mxu0 0
        %1599 = vmatmul.mubr.bf16.gmra.mxu0 %v1456
        %v1600 = vpop.f32.mrf.mxu0
        %v1601 = vadd.f32 0.0, %v1600
        %v1602 = vpop.f32.mrf.mxu0
        %v1603 = vadd.f32 0.0, %v1602
        %v1604 = vpop.f32.mrf.mxu0
        %v1605 = vadd.f32 0.0, %v1604
        %v1606 = vpop.f32.mrf.mxu0
        %v1607 = vadd.f32 0.0, %v1606
        %1608 = vmatprep.mubr.bf16.mxu0 0
        %1609 = vmatmul.mubr.bf16.gmra.mxu0 %v1459
        %v1610 = vpop.f32.mrf.mxu0
        %v1611 = vadd.f32 0.0, %v1610
        %v1612 = vpop.f32.mrf.mxu0
        %v1613 = vadd.f32 0.0, %v1612
        %v1614 = vpop.f32.mrf.mxu0
        %v1615 = vadd.f32 0.0, %v1614
        %v1616 = vpop.f32.mrf.mxu0
        %v1617 = vadd.f32 0.0, %v1616
        %1618 = vmatprep.mubr.bf16.mxu0 0
        %1619 = vmatmul.mubr.bf16.gmra.mxu0 %v1462
        %v1620 = vpop.f32.mrf.mxu0
        %v1621 = vadd.f32 0.0, %v1620
        %v1622 = vpop.f32.mrf.mxu0
        %v1623 = vadd.f32 0.0, %v1622
        %v1624 = vpop.f32.mrf.mxu0
        %v1625 = vadd.f32 0.0, %v1624
        %v1626 = vpop.f32.mrf.mxu0
        %v1627 = vadd.f32 0.0, %v1626
        %1628 = vmatprep.mubr.bf16.mxu0 0
        %1629 = vmatmul.mubr.bf16.gmra.mxu0 %v1465
        %v1630 = vpop.f32.mrf.mxu0
        %v1631 = vadd.f32 0.0, %v1630
        %v1632 = vpop.f32.mrf.mxu0
        %v1633 = vadd.f32 0.0, %v1632
        %v1634 = vpop.f32.mrf.mxu0
        %v1635 = vadd.f32 0.0, %v1634
        %v1636 = vpop.f32.mrf.mxu0
        %v1637 = vadd.f32 0.0, %v1636
        %1638 = vmatprep.mubr.bf16.mxu0 0
        %1639 = vmatmul.mubr.bf16.gmra.mxu0 %v1468
        %v1640 = vpop.f32.mrf.mxu0
        %v1641 = vadd.f32 0.0, %v1640
        %v1642 = vpop.f32.mrf.mxu0
        %v1643 = vadd.f32 0.0, %v1642
        %v1644 = vpop.f32.mrf.mxu0
        %v1645 = vadd.f32 0.0, %v1644
        %v1646 = vpop.f32.mrf.mxu0
        %v1647 = vadd.f32 0.0, %v1646
        %1648 = vmatprep.mubr.bf16.mxu0 0
        %1649 = vmatmul.mubr.bf16.gmra.mxu0 %v1471
        %v1650 = vpop.f32.mrf.mxu0
        %v1651 = vadd.f32 0.0, %v1650
        %v1652 = vpop.f32.mrf.mxu0
        %v1653 = vadd.f32 0.0, %v1652
        %v1654 = vpop.f32.mrf.mxu0
        %v1655 = vadd.f32 0.0, %v1654
        %v1656 = vpop.f32.mrf.mxu0
        %v1657 = vadd.f32 0.0, %v1656
        %1658 = vmatprep.mubr.bf16.mxu0 0
        %1659 = vmatmul.mubr.bf16.gmra.mxu0 %v1474
        %v1660 = vpop.f32.mrf.mxu0
        %v1661 = vadd.f32 0.0, %v1660
        %v1662 = vpop.f32.mrf.mxu0
        %v1663 = vadd.f32 0.0, %v1662
        %v1664 = vpop.f32.mrf.mxu0
        %v1665 = vadd.f32 0.0, %v1664
        %v1666 = vpop.f32.mrf.mxu0
        %v1667 = vadd.f32 0.0, %v1666
        %1668 = vdwg.mxu0
        %1669 = vmatprep.subr.bf16.mxu0 0
        %1670 = vmatpush1.bf16.msra.mxu0 0
        %1671 = vmatprep.subr.bf16.mxu0 0
        %1672 = vmatpush1.bf16.msra.mxu0 0
        %1673 = vmatprep.subr.bf16.mxu0 0
        %1674 = vmatpush1.bf16.msra.mxu0 0
        %1675 = vmatprep.subr.bf16.mxu0 0
        %1676 = vmatpush1.bf16.msra.mxu0 0
        %1677 = vmatprep.subr.bf16.mxu0 %v1410
        %1678 = vmatpush1.bf16.msra.mxu0 %v1409
        %1679 = vmatprep.subr.bf16.mxu0 %v1406
        %1680 = vmatpush1.bf16.msra.mxu0 %v1405
        %1681 = vmatprep.subr.bf16.mxu0 %v1402
        %1682 = vmatpush1.bf16.msra.mxu0 %v1401
        %1683 = vmatprep.subr.bf16.mxu0 %v1398
        %1684 = vmatpush1.bf16.msra.mxu0 %v1397
        %1685 = vmatprep.subr.bf16.mxu0 0
        %1686 = vmatpush2.bf16.msra.mxu0 0
        %1687 = vmatprep.subr.bf16.mxu0 0
        %1688 = vmatpush2.bf16.msra.mxu0 0
        %1689 = vmatprep.subr.bf16.mxu0 0
        %1690 = vmatpush2.bf16.msra.mxu0 0
        %1691 = vmatprep.subr.bf16.mxu0 0
        %1692 = vmatpush2.bf16.msra.mxu0 0
        %1693 = vmatprep.subr.bf16.mxu0 0
        %1694 = vmatpush2.bf16.msra.mxu0 0
        %1695 = vmatprep.subr.bf16.mxu0 0
        %1696 = vmatpush2.bf16.msra.mxu0 0
        %1697 = vmatprep.subr.bf16.mxu0 0
        %1698 = vmatpush2.bf16.msra.mxu0 0
        %1699 = vmatprep.subr.bf16.mxu0 0
        %1700 = vmatpush2.bf16.msra.mxu0 0
        %1701 = vmatprep.mubr.bf16.mxu0 0
        %1702 = vmatmul.mubr.bf16.gmra.mxu0 %v1429
        %v1703 = vpop.f32.mrf.mxu0
        %v1704 = vadd.f32 0.0, %v1703
        %v1705 = vpop.f32.mrf.mxu0
        %v1706 = vadd.f32 0.0, %v1705
        %v1707 = vpop.f32.mrf.mxu0
        %v1708 = vadd.f32 0.0, %v1707
        %v1709 = vpop.f32.mrf.mxu0
        %v1710 = vadd.f32 0.0, %v1709
        %1711 = vmatprep.mubr.bf16.mxu0 0
        %1712 = vmatmul.mubr.bf16.gmra.mxu0 %v1432
        %v1713 = vpop.f32.mrf.mxu0
        %v1714 = vadd.f32 0.0, %v1713
        %v1715 = vpop.f32.mrf.mxu0
        %v1716 = vadd.f32 0.0, %v1715
        %v1717 = vpop.f32.mrf.mxu0
        %v1718 = vadd.f32 0.0, %v1717
        %v1719 = vpop.f32.mrf.mxu0
        %v1720 = vadd.f32 0.0, %v1719
        %1721 = vmatprep.mubr.bf16.mxu0 0
        %1722 = vmatmul.mubr.bf16.gmra.mxu0 %v1435
        %v1723 = vpop.f32.mrf.mxu0
        %v1724 = vadd.f32 0.0, %v1723
        %v1725 = vpop.f32.mrf.mxu0
        %v1726 = vadd.f32 0.0, %v1725
        %v1727 = vpop.f32.mrf.mxu0
        %v1728 = vadd.f32 0.0, %v1727
        %v1729 = vpop.f32.mrf.mxu0
        %v1730 = vadd.f32 0.0, %v1729
        %1731 = vmatprep.mubr.bf16.mxu0 0
        %1732 = vmatmul.mubr.bf16.gmra.mxu0 %v1438
        %v1733 = vpop.f32.mrf.mxu0
        %v1734 = vadd.f32 0.0, %v1733
        %v1735 = vpop.f32.mrf.mxu0
        %v1736 = vadd.f32 0.0, %v1735
        %v1737 = vpop.f32.mrf.mxu0
        %v1738 = vadd.f32 0.0, %v1737
        %v1739 = vpop.f32.mrf.mxu0
        %v1740 = vadd.f32 0.0, %v1739
        %1741 = vmatprep.mubr.bf16.mxu0 0
        %1742 = vmatmul.mubr.bf16.gmra.mxu0 %v1441
        %v1743 = vpop.f32.mrf.mxu0
        %v1744 = vadd.f32 0.0, %v1743
        %v1745 = vpop.f32.mrf.mxu0
        %v1746 = vadd.f32 0.0, %v1745
        %v1747 = vpop.f32.mrf.mxu0
        %v1748 = vadd.f32 0.0, %v1747
        %v1749 = vpop.f32.mrf.mxu0
        %v1750 = vadd.f32 0.0, %v1749
        %1751 = vmatprep.mubr.bf16.mxu0 0
        %1752 = vmatmul.mubr.bf16.gmra.mxu0 %v1444
        %v1753 = vpop.f32.mrf.mxu0
        %v1754 = vadd.f32 0.0, %v1753
        %v1755 = vpop.f32.mrf.mxu0
        %v1756 = vadd.f32 0.0, %v1755
        %v1757 = vpop.f32.mrf.mxu0
        %v1758 = vadd.f32 0.0, %v1757
        %v1759 = vpop.f32.mrf.mxu0
        %v1760 = vadd.f32 0.0, %v1759
        %1761 = vmatprep.mubr.bf16.mxu0 0
        %1762 = vmatmul.mubr.bf16.gmra.mxu0 %v1447
        %v1763 = vpop.f32.mrf.mxu0
        %v1764 = vadd.f32 0.0, %v1763
        %v1765 = vpop.f32.mrf.mxu0
        %v1766 = vadd.f32 0.0, %v1765
        %v1767 = vpop.f32.mrf.mxu0
        %v1768 = vadd.f32 0.0, %v1767
        %v1769 = vpop.f32.mrf.mxu0
        %v1770 = vadd.f32 0.0, %v1769
        %1771 = vmatprep.mubr.bf16.mxu0 0
        %1772 = vmatmul.mubr.bf16.gmra.mxu0 %v1450
        %v1773 = vpop.f32.mrf.mxu0
        %v1774 = vadd.f32 0.0, %v1773
        %v1775 = vpop.f32.mrf.mxu0
        %v1776 = vadd.f32 0.0, %v1775
        %v1777 = vpop.f32.mrf.mxu0
        %v1778 = vadd.f32 0.0, %v1777
        %v1779 = vpop.f32.mrf.mxu0
        %v1780 = vadd.f32 0.0, %v1779
        %1781 = vmatprep.mubr.bf16.mxu0 0
        %1782 = vmatmul.mubr.bf16.gmra.mxu0 %v1453
        %v1783 = vpop.f32.mrf.mxu0
        %v1784 = vadd.f32 0.0, %v1783
        %v1785 = vpop.f32.mrf.mxu0
        %v1786 = vadd.f32 0.0, %v1785
        %v1787 = vpop.f32.mrf.mxu0
        %v1788 = vadd.f32 0.0, %v1787
        %v1789 = vpop.f32.mrf.mxu0
        %v1790 = vadd.f32 0.0, %v1789
        %1791 = vmatprep.mubr.bf16.mxu0 0
        %1792 = vmatmul.mubr.bf16.gmra.mxu0 %v1456
        %v1793 = vpop.f32.mrf.mxu0
        %v1794 = vadd.f32 0.0, %v1793
        %v1795 = vpop.f32.mrf.mxu0
        %v1796 = vadd.f32 0.0, %v1795
        %v1797 = vpop.f32.mrf.mxu0
        %v1798 = vadd.f32 0.0, %v1797
        %v1799 = vpop.f32.mrf.mxu0
        %v1800 = vadd.f32 0.0, %v1799
        %1801 = vmatprep.mubr.bf16.mxu0 0
        %1802 = vmatmul.mubr.bf16.gmra.mxu0 %v1459
        %v1803 = vpop.f32.mrf.mxu0
        %v1804 = vadd.f32 0.0, %v1803
        %v1805 = vpop.f32.mrf.mxu0
        %v1806 = vadd.f32 0.0, %v1805
        %v1807 = vpop.f32.mrf.mxu0
        %v1808 = vadd.f32 0.0, %v1807
        %v1809 = vpop.f32.mrf.mxu0
        %v1810 = vadd.f32 0.0, %v1809
        %1811 = vmatprep.mubr.bf16.mxu0 0
        %1812 = vmatmul.mubr.bf16.gmra.mxu0 %v1462
        %v1813 = vpop.f32.mrf.mxu0
        %v1814 = vadd.f32 0.0, %v1813
        %v1815 = vpop.f32.mrf.mxu0
        %v1816 = vadd.f32 0.0, %v1815
        %v1817 = vpop.f32.mrf.mxu0
        %v1818 = vadd.f32 0.0, %v1817
        %v1819 = vpop.f32.mrf.mxu0
        %v1820 = vadd.f32 0.0, %v1819
        %1821 = vmatprep.mubr.bf16.mxu0 0
        %1822 = vmatmul.mubr.bf16.gmra.mxu0 %v1465
        %v1823 = vpop.f32.mrf.mxu0
        %v1824 = vadd.f32 0.0, %v1823
        %v1825 = vpop.f32.mrf.mxu0
        %v1826 = vadd.f32 0.0, %v1825
        %v1827 = vpop.f32.mrf.mxu0
        %v1828 = vadd.f32 0.0, %v1827
        %v1829 = vpop.f32.mrf.mxu0
        %v1830 = vadd.f32 0.0, %v1829
        %1831 = vmatprep.mubr.bf16.mxu0 0
        %1832 = vmatmul.mubr.bf16.gmra.mxu0 %v1468
        %v1833 = vpop.f32.mrf.mxu0
        %v1834 = vadd.f32 0.0, %v1833
        %v1835 = vpop.f32.mrf.mxu0
        %v1836 = vadd.f32 0.0, %v1835
        %v1837 = vpop.f32.mrf.mxu0
        %v1838 = vadd.f32 0.0, %v1837
        %v1839 = vpop.f32.mrf.mxu0
        %v1840 = vadd.f32 0.0, %v1839
        %1841 = vmatprep.mubr.bf16.mxu0 0
        %1842 = vmatmul.mubr.bf16.gmra.mxu0 %v1471
        %v1843 = vpop.f32.mrf.mxu0
        %v1844 = vadd.f32 0.0, %v1843
        %v1845 = vpop.f32.mrf.mxu0
        %v1846 = vadd.f32 0.0, %v1845
        %v1847 = vpop.f32.mrf.mxu0
        %v1848 = vadd.f32 0.0, %v1847
        %v1849 = vpop.f32.mrf.mxu0
        %v1850 = vadd.f32 0.0, %v1849
        %1851 = vmatprep.mubr.bf16.mxu0 0
        %1852 = vmatmul.mubr.bf16.gmra.mxu0 %v1474
        %v1853 = vpop.f32.mrf.mxu0
        %v1854 = vadd.f32 0.0, %v1853
        %v1855 = vpop.f32.mrf.mxu0
        %v1856 = vadd.f32 0.0, %v1855
        %v1857 = vpop.f32.mrf.mxu0
        %v1858 = vadd.f32 0.0, %v1857
        %v1859 = vpop.f32.mrf.mxu0
        %v1860 = vadd.f32 0.0, %v1859
        %1861 = vdwg.mxu0
        %v1862 = vpack.c.bf16 %v1236, %v1235
        %v1863 = vpack.c.bf16 %v1238, %v1237
        %v1864 = vpack.c.bf16 %v1240, %v1239
        %v1865 = vpack.c.bf16 %v1242, %v1241
        %v1866 = vpack.c.bf16 %v1244, %v1243
        %v1867 = vpack.c.bf16 %v1246, %v1245
        %v1868 = vpack.c.bf16 %v1248, %v1247
        %v1869 = vpack.c.bf16 %v1250, %v1249
        %v1870 = vpack.c.bf16 %v1252, %v1251
        %v1871 = vpack.c.bf16 %v1254, %v1253
        %v1872 = vpack.c.bf16 %v1256, %v1255
        %v1873 = vpack.c.bf16 %v1258, %v1257
        %v1874 = vpack.c.bf16 %v1260, %v1259
        %v1875 = vpack.c.bf16 %v1262, %v1261
        %v1876 = vpack.c.bf16 %v1264, %v1263
        %v1877 = vpack.c.bf16 %v1266, %v1265
        %1894 = vrot.lane.b32.xlu0 %v1862, 64
        %v1895 = vpop.permute.xlu0 %1894
        %1896 = vrot.lane.b32.xlu0 %v1863, 64
        %v1897 = vpop.permute.xlu0 %1896
        %1898 = vrot.lane.b32.xlu0 %v1864, 64
        %v1899 = vpop.permute.xlu0 %1898
        %1900 = vrot.lane.b32.xlu0 %v1865, 64
        %v1901 = vpop.permute.xlu0 %1900
        %1902 = vrot.lane.b32.xlu0 %v1866, 64
        %v1903 = vpop.permute.xlu0 %1902
        %1904 = vrot.lane.b32.xlu0 %v1867, 64
        %v1905 = vpop.permute.xlu0 %1904
        %1906 = vrot.lane.b32.xlu0 %v1868, 64
        %v1907 = vpop.permute.xlu0 %1906
        %1908 = vrot.lane.b32.xlu0 %v1869, 64
        %v1909 = vpop.permute.xlu0 %1908
        %1910 = vrot.lane.b32.xlu0 %v1870, 64
        %v1911 = vpop.permute.xlu0 %1910
        %1912 = vrot.lane.b32.xlu0 %v1871, 64
        %v1913 = vpop.permute.xlu0 %1912
        %1914 = vrot.lane.b32.xlu0 %v1872, 64
        %v1915 = vpop.permute.xlu0 %1914
        %1916 = vrot.lane.b32.xlu0 %v1873, 64
        %v1917 = vpop.permute.xlu0 %1916
        %1918 = vrot.lane.b32.xlu0 %v1874, 64
        %v1919 = vpop.permute.xlu0 %1918
        %1920 = vrot.lane.b32.xlu0 %v1875, 64
        %v1921 = vpop.permute.xlu0 %1920
        %1922 = vrot.lane.b32.xlu0 %v1876, 64
        %v1923 = vpop.permute.xlu0 %1922
        %1924 = vrot.lane.b32.xlu0 %v1877, 64
        %v1925 = vpop.permute.xlu0 %1924
        %v1928 = vsel %vm1427, %v1862, %v1895
        %v1932 = vsel %vm1427, %v1863, %v1897
        %v1936 = vsel %vm1427, %v1864, %v1899
        %v1940 = vsel %vm1427, %v1865, %v1901
        %v1944 = vsel %vm1427, %v1866, %v1903
        %v1948 = vsel %vm1427, %v1867, %v1905
        %v1952 = vsel %vm1427, %v1868, %v1907
        %v1956 = vsel %vm1427, %v1869, %v1909
        %v1960 = vsel %vm1427, %v1870, %v1911
        %v1964 = vsel %vm1427, %v1871, %v1913
        %v1968 = vsel %vm1427, %v1872, %v1915
        %v1972 = vsel %vm1427, %v1873, %v1917
        %v1976 = vsel %vm1427, %v1874, %v1919
        %v1980 = vsel %vm1427, %v1875, %v1921
        %v1984 = vsel %vm1427, %v1876, %v1923
        %v1988 = vsel %vm1427, %v1877, %v1925
        %v1990 = vpack.c.bf16 %v1515, %v1511
        %v1991 = vpack.c.bf16 %v1517, %v1513
        %v1992 = vpack.c.bf16 %v1708, %v1704
        %v1993 = vpack.c.bf16 %v1710, %v1706
        %v1994 = vpack.c.bf16 %v1525, %v1521
        %v1995 = vpack.c.bf16 %v1527, %v1523
        %v1996 = vpack.c.bf16 %v1718, %v1714
        %v1997 = vpack.c.bf16 %v1720, %v1716
        %v1998 = vpack.c.bf16 %v1535, %v1531
        %v1999 = vpack.c.bf16 %v1537, %v1533
        %v2000 = vpack.c.bf16 %v1728, %v1724
        %v2001 = vpack.c.bf16 %v1730, %v1726
        %v2002 = vpack.c.bf16 %v1545, %v1541
        %v2003 = vpack.c.bf16 %v1547, %v1543
        %v2004 = vpack.c.bf16 %v1738, %v1734
        %v2005 = vpack.c.bf16 %v1740, %v1736
        %v2006 = vpack.c.bf16 %v1555, %v1551
        %v2007 = vpack.c.bf16 %v1557, %v1553
        %v2008 = vpack.c.bf16 %v1748, %v1744
        %v2009 = vpack.c.bf16 %v1750, %v1746
        %v2010 = vpack.c.bf16 %v1565, %v1561
        %v2011 = vpack.c.bf16 %v1567, %v1563
        %v2012 = vpack.c.bf16 %v1758, %v1754
        %v2013 = vpack.c.bf16 %v1760, %v1756
        %v2014 = vpack.c.bf16 %v1575, %v1571
        %v2015 = vpack.c.bf16 %v1577, %v1573
        %v2016 = vpack.c.bf16 %v1768, %v1764
        %v2017 = vpack.c.bf16 %v1770, %v1766
        %v2018 = vpack.c.bf16 %v1585, %v1581
        %v2019 = vpack.c.bf16 %v1587, %v1583
        %v2020 = vpack.c.bf16 %v1778, %v1774
        %v2021 = vpack.c.bf16 %v1780, %v1776
        %v2022 = vpack.c.bf16 %v1595, %v1591
        %v2023 = vpack.c.bf16 %v1597, %v1593
        %v2024 = vpack.c.bf16 %v1788, %v1784
        %v2025 = vpack.c.bf16 %v1790, %v1786
        %v2026 = vpack.c.bf16 %v1605, %v1601
        %v2027 = vpack.c.bf16 %v1607, %v1603
        %v2028 = vpack.c.bf16 %v1798, %v1794
        %v2029 = vpack.c.bf16 %v1800, %v1796
        %v2030 = vpack.c.bf16 %v1615, %v1611
        %v2031 = vpack.c.bf16 %v1617, %v1613
        %v2032 = vpack.c.bf16 %v1808, %v1804
        %v2033 = vpack.c.bf16 %v1810, %v1806
        %v2034 = vpack.c.bf16 %v1625, %v1621
        %v2035 = vpack.c.bf16 %v1627, %v1623
        %v2036 = vpack.c.bf16 %v1818, %v1814
        %v2037 = vpack.c.bf16 %v1820, %v1816
        %v2038 = vpack.c.bf16 %v1635, %v1631
        %v2039 = vpack.c.bf16 %v1637, %v1633
        %v2040 = vpack.c.bf16 %v1828, %v1824
        %v2041 = vpack.c.bf16 %v1830, %v1826
        %v2042 = vpack.c.bf16 %v1645, %v1641
        %v2043 = vpack.c.bf16 %v1647, %v1643
        %v2044 = vpack.c.bf16 %v1838, %v1834
        %v2045 = vpack.c.bf16 %v1840, %v1836
        %v2046 = vpack.c.bf16 %v1655, %v1651
        %v2047 = vpack.c.bf16 %v1657, %v1653
        %v2048 = vpack.c.bf16 %v1848, %v1844
        %v2049 = vpack.c.bf16 %v1850, %v1846
        %v2050 = vpack.c.bf16 %v1665, %v1661
        %v2051 = vpack.c.bf16 %v1667, %v1663
        %v2052 = vpack.c.bf16 %v1858, %v1854
        %v2053 = vpack.c.bf16 %v1860, %v1856
        %v2054 = vmul.bf16 %v1928, %v1990
        %v2055 = vmul.bf16 %v1928, %v1991
        %v2056 = vmul.bf16 %v1928, %v1992
        %v2057 = vmul.bf16 %v1928, %v1993
        %v2058 = vmul.bf16 %v1932, %v1994
        %v2059 = vmul.bf16 %v1932, %v1995
        %v2060 = vmul.bf16 %v1932, %v1996
        %v2061 = vmul.bf16 %v1932, %v1997
        %v2062 = vmul.bf16 %v1936, %v1998
        %v2063 = vmul.bf16 %v1936, %v1999
        %v2064 = vmul.bf16 %v1936, %v2000
        %v2065 = vmul.bf16 %v1936, %v2001
        %v2066 = vmul.bf16 %v1940, %v2002
        %v2067 = vmul.bf16 %v1940, %v2003
        %v2068 = vmul.bf16 %v1940, %v2004
        %v2069 = vmul.bf16 %v1940, %v2005
        %v2070 = vmul.bf16 %v1944, %v2006
        %v2071 = vmul.bf16 %v1944, %v2007
        %v2072 = vmul.bf16 %v1944, %v2008
        %v2073 = vmul.bf16 %v1944, %v2009
        %v2074 = vmul.bf16 %v1948, %v2010
        %v2075 = vmul.bf16 %v1948, %v2011
        %v2076 = vmul.bf16 %v1948, %v2012
        %v2077 = vmul.bf16 %v1948, %v2013
        %v2078 = vmul.bf16 %v1952, %v2014
        %v2079 = vmul.bf16 %v1952, %v2015
        %v2080 = vmul.bf16 %v1952, %v2016
        %v2081 = vmul.bf16 %v1952, %v2017
        %v2082 = vmul.bf16 %v1956, %v2018
        %v2083 = vmul.bf16 %v1956, %v2019
        %v2084 = vmul.bf16 %v1956, %v2020
        %v2085 = vmul.bf16 %v1956, %v2021
        %v2086 = vmul.bf16 %v1960, %v2022
        %v2087 = vmul.bf16 %v1960, %v2023
        %v2088 = vmul.bf16 %v1960, %v2024
        %v2089 = vmul.bf16 %v1960, %v2025
        %v2090 = vmul.bf16 %v1964, %v2026
        %v2091 = vmul.bf16 %v1964, %v2027
        %v2092 = vmul.bf16 %v1964, %v2028
        %v2093 = vmul.bf16 %v1964, %v2029
        %v2094 = vmul.bf16 %v1968, %v2030
        %v2095 = vmul.bf16 %v1968, %v2031
        %v2096 = vmul.bf16 %v1968, %v2032
        %v2097 = vmul.bf16 %v1968, %v2033
        %v2098 = vmul.bf16 %v1972, %v2034
        %v2099 = vmul.bf16 %v1972, %v2035
        %v2100 = vmul.bf16 %v1972, %v2036
        %v2101 = vmul.bf16 %v1972, %v2037
        %v2102 = vmul.bf16 %v1976, %v2038
        %v2103 = vmul.bf16 %v1976, %v2039
        %v2104 = vmul.bf16 %v1976, %v2040
        %v2105 = vmul.bf16 %v1976, %v2041
        %v2106 = vmul.bf16 %v1980, %v2042
        %v2107 = vmul.bf16 %v1980, %v2043
        %v2108 = vmul.bf16 %v1980, %v2044
        %v2109 = vmul.bf16 %v1980, %v2045
        %v2110 = vmul.bf16 %v1984, %v2046
        %v2111 = vmul.bf16 %v1984, %v2047
        %v2112 = vmul.bf16 %v1984, %v2048
        %v2113 = vmul.bf16 %v1984, %v2049
        %v2114 = vmul.bf16 %v1988, %v2050
        %v2115 = vmul.bf16 %v1988, %v2051
        %v2116 = vmul.bf16 %v1988, %v2052
        %v2117 = vmul.bf16 %v1988, %v2053
        %v2118 = vld [vmem:[#allocation13] sm:$0xf]
        %v2119 = vld [vmem:[#allocation13 + $0x4] sm:$0xf]
        %v2120 = vld [vmem:[#allocation13 + $0x8] sm:$0xf]
        %v2121 = vld [vmem:[#allocation13 + $0xc] sm:$0xf]
        %v2122 = vld [vmem:[#allocation13 + $0x10] sm:$0xf]
        %v2123 = vld [vmem:[#allocation13 + $0x14] sm:$0xf]
        %v2124 = vld [vmem:[#allocation13 + $0x18] sm:$0xf]
        %v2125 = vld [vmem:[#allocation13 + $0x1c] sm:$0xf]
        %v2126 = vld [vmem:[#allocation13 + $0x20] sm:$0xf]
        %v2127 = vld [vmem:[#allocation13 + $0x24] sm:$0xf]
        %v2128 = vld [vmem:[#allocation13 + $0x28] sm:$0xf]
        %v2129 = vld [vmem:[#allocation13 + $0x2c] sm:$0xf]
        %v2130 = vld [vmem:[#allocation13 + $0x30] sm:$0xf]
        %v2131 = vld [vmem:[#allocation13 + $0x34] sm:$0xf]
        %v2132 = vld [vmem:[#allocation13 + $0x38] sm:$0xf]
        %v2133 = vld [vmem:[#allocation13 + $0x3c] sm:$0xf]
        %v2134 = vld [vmem:[#allocation13 + $0x40] sm:$0xf]
        %v2135 = vld [vmem:[#allocation13 + $0x44] sm:$0xf]
        %v2136 = vld [vmem:[#allocation13 + $0x48] sm:$0xf]
        %v2137 = vld [vmem:[#allocation13 + $0x4c] sm:$0xf]
        %v2138 = vld [vmem:[#allocation13 + $0x50] sm:$0xf]
        %v2139 = vld [vmem:[#allocation13 + $0x54] sm:$0xf]
        %v2140 = vld [vmem:[#allocation13 + $0x58] sm:$0xf]
        %v2141 = vld [vmem:[#allocation13 + $0x5c] sm:$0xf]
        %v2142 = vld [vmem:[#allocation13 + $0x60] sm:$0xf]
        %v2143 = vld [vmem:[#allocation13 + $0x64] sm:$0xf]
        %v2144 = vld [vmem:[#allocation13 + $0x68] sm:$0xf]
        %v2145 = vld [vmem:[#allocation13 + $0x6c] sm:$0xf]
        %v2146 = vld [vmem:[#allocation13 + $0x70] sm:$0xf]
        %v2147 = vld [vmem:[#allocation13 + $0x74] sm:$0xf]
        %v2148 = vld [vmem:[#allocation13 + $0x78] sm:$0xf]
        %v2149 = vld [vmem:[#allocation13 + $0x7c] sm:$0xf]
        %v2150 = vld [vmem:[#allocation13 + $0x80] sm:$0xf]
        %v2151 = vld [vmem:[#allocation13 + $0x84] sm:$0xf]
        %v2152 = vld [vmem:[#allocation13 + $0x88] sm:$0xf]
        %v2153 = vld [vmem:[#allocation13 + $0x8c] sm:$0xf]
        %v2154 = vld [vmem:[#allocation13 + $0x90] sm:$0xf]
        %v2155 = vld [vmem:[#allocation13 + $0x94] sm:$0xf]
        %v2156 = vld [vmem:[#allocation13 + $0x98] sm:$0xf]
        %v2157 = vld [vmem:[#allocation13 + $0x9c] sm:$0xf]
        %v2158 = vld [vmem:[#allocation13 + $0xa0] sm:$0xf]
        %v2159 = vld [vmem:[#allocation13 + $0xa4] sm:$0xf]
        %v2160 = vld [vmem:[#allocation13 + $0xa8] sm:$0xf]
        %v2161 = vld [vmem:[#allocation13 + $0xac] sm:$0xf]
        %v2162 = vld [vmem:[#allocation13 + $0xb0] sm:$0xf]
        %v2163 = vld [vmem:[#allocation13 + $0xb4] sm:$0xf]
        %v2164 = vld [vmem:[#allocation13 + $0xb8] sm:$0xf]
        %v2165 = vld [vmem:[#allocation13 + $0xbc] sm:$0xf]
        %v2166 = vld [vmem:[#allocation13 + $0xc0] sm:$0xf]
        %v2167 = vld [vmem:[#allocation13 + $0xc4] sm:$0xf]
        %v2168 = vld [vmem:[#allocation13 + $0xc8] sm:$0xf]
        %v2169 = vld [vmem:[#allocation13 + $0xcc] sm:$0xf]
        %v2170 = vld [vmem:[#allocation13 + $0xd0] sm:$0xf]
        %v2171 = vld [vmem:[#allocation13 + $0xd4] sm:$0xf]
        %v2172 = vld [vmem:[#allocation13 + $0xd8] sm:$0xf]
        %v2173 = vld [vmem:[#allocation13 + $0xdc] sm:$0xf]
        %v2174 = vld [vmem:[#allocation13 + $0xe0] sm:$0xf]
        %v2175 = vld [vmem:[#allocation13 + $0xe4] sm:$0xf]
        %v2176 = vld [vmem:[#allocation13 + $0xe8] sm:$0xf]
        %v2177 = vld [vmem:[#allocation13 + $0xec] sm:$0xf]
        %v2178 = vld [vmem:[#allocation13 + $0xf0] sm:$0xf]
        %v2179 = vld [vmem:[#allocation13 + $0xf4] sm:$0xf]
        %v2180 = vld [vmem:[#allocation13 + $0xf8] sm:$0xf]
        %v2181 = vld [vmem:[#allocation13 + $0xfc] sm:$0xf]
        %v2182 = vld [vmem:[%s8] sm:$0x1]
        %v2184 = vlaneseq
        %v2185 = vshrl.u32 %v2184, 7
        %v2186 = vsub.s32 0, %v2185
        %v2187 = vrot.slane %v2182, %v2186
        %v2253 = vunpack.c.l.b16 %v2118
        %v2254 = vunpack.c.l.b16 %v2119
        %v2255 = vunpack.c.l.b16 %v2120
        %v2256 = vunpack.c.l.b16 %v2121
        %v2257 = vunpack.c.l.b16 %v2122
        %v2258 = vunpack.c.l.b16 %v2123
        %v2259 = vunpack.c.l.b16 %v2124
        %v2260 = vunpack.c.l.b16 %v2125
        %v2261 = vunpack.c.l.b16 %v2126
        %v2262 = vunpack.c.l.b16 %v2127
        %v2263 = vunpack.c.l.b16 %v2128
        %v2264 = vunpack.c.l.b16 %v2129
        %v2265 = vunpack.c.l.b16 %v2130
        %v2266 = vunpack.c.l.b16 %v2131
        %v2267 = vunpack.c.l.b16 %v2132
        %v2268 = vunpack.c.l.b16 %v2133
        %v2269 = vunpack.c.l.b16 %v2134
        %v2270 = vunpack.c.l.b16 %v2135
        %v2271 = vunpack.c.l.b16 %v2136
        %v2272 = vunpack.c.l.b16 %v2137
        %v2273 = vunpack.c.l.b16 %v2138
        %v2274 = vunpack.c.l.b16 %v2139
        %v2275 = vunpack.c.l.b16 %v2140
        %v2276 = vunpack.c.l.b16 %v2141
        %v2277 = vunpack.c.l.b16 %v2142
        %v2278 = vunpack.c.l.b16 %v2143
        %v2279 = vunpack.c.l.b16 %v2144
        %v2280 = vunpack.c.l.b16 %v2145
        %v2281 = vunpack.c.l.b16 %v2146
        %v2282 = vunpack.c.l.b16 %v2147
        %v2283 = vunpack.c.l.b16 %v2148
        %v2284 = vunpack.c.l.b16 %v2149
        %v2285 = vunpack.c.l.b16 %v2150
        %v2286 = vunpack.c.l.b16 %v2151
        %v2287 = vunpack.c.l.b16 %v2152
        %v2288 = vunpack.c.l.b16 %v2153
        %v2289 = vunpack.c.l.b16 %v2154
        %v2290 = vunpack.c.l.b16 %v2155
        %v2291 = vunpack.c.l.b16 %v2156
        %v2292 = vunpack.c.l.b16 %v2157
        %v2293 = vunpack.c.l.b16 %v2158
        %v2294 = vunpack.c.l.b16 %v2159
        %v2295 = vunpack.c.l.b16 %v2160
        %v2296 = vunpack.c.l.b16 %v2161
        %v2297 = vunpack.c.l.b16 %v2162
        %v2298 = vunpack.c.l.b16 %v2163
        %v2299 = vunpack.c.l.b16 %v2164
        %v2300 = vunpack.c.l.b16 %v2165
        %v2301 = vunpack.c.l.b16 %v2166
        %v2302 = vunpack.c.l.b16 %v2167
        %v2303 = vunpack.c.l.b16 %v2168
        %v2304 = vunpack.c.l.b16 %v2169
        %v2305 = vunpack.c.l.b16 %v2170
        %v2306 = vunpack.c.l.b16 %v2171
        %v2307 = vunpack.c.l.b16 %v2172
        %v2308 = vunpack.c.l.b16 %v2173
        %v2309 = vunpack.c.l.b16 %v2174
        %v2310 = vunpack.c.l.b16 %v2175
        %v2311 = vunpack.c.l.b16 %v2176
        %v2312 = vunpack.c.l.b16 %v2177
        %v2313 = vunpack.c.l.b16 %v2178
        %v2314 = vunpack.c.l.b16 %v2179
        %v2315 = vunpack.c.l.b16 %v2180
        %v2316 = vunpack.c.l.b16 %v2181
        %v2317 = vpack.c.b16 %v2254, %v2253
        %v2318 = vpack.c.b16 %v2256, %v2255
        %v2319 = vpack.c.b16 %v2258, %v2257
        %v2320 = vpack.c.b16 %v2260, %v2259
        %v2321 = vpack.c.b16 %v2262, %v2261
        %v2322 = vpack.c.b16 %v2264, %v2263
        %v2323 = vpack.c.b16 %v2266, %v2265
        %v2324 = vpack.c.b16 %v2268, %v2267
        %v2325 = vpack.c.b16 %v2270, %v2269
        %v2326 = vpack.c.b16 %v2272, %v2271
        %v2327 = vpack.c.b16 %v2274, %v2273
        %v2328 = vpack.c.b16 %v2276, %v2275
        %v2329 = vpack.c.b16 %v2278, %v2277
        %v2330 = vpack.c.b16 %v2280, %v2279
        %v2331 = vpack.c.b16 %v2282, %v2281
        %v2332 = vpack.c.b16 %v2284, %v2283
        %v2333 = vpack.c.b16 %v2286, %v2285
        %v2334 = vpack.c.b16 %v2288, %v2287
        %v2335 = vpack.c.b16 %v2290, %v2289
        %v2336 = vpack.c.b16 %v2292, %v2291
        %v2337 = vpack.c.b16 %v2294, %v2293
        %v2338 = vpack.c.b16 %v2296, %v2295
        %v2339 = vpack.c.b16 %v2298, %v2297
        %v2340 = vpack.c.b16 %v2300, %v2299
        %v2341 = vpack.c.b16 %v2302, %v2301
        %v2342 = vpack.c.b16 %v2304, %v2303
        %v2343 = vpack.c.b16 %v2306, %v2305
        %v2344 = vpack.c.b16 %v2308, %v2307
        %v2345 = vpack.c.b16 %v2310, %v2309
        %v2346 = vpack.c.b16 %v2312, %v2311
        %v2347 = vpack.c.b16 %v2314, %v2313
        %v2348 = vpack.c.b16 %v2316, %v2315
        %2381 = vmatprep.subr.bf16.mxu0 0
        %2382 = vmatpush1.bf16.msra.mxu0 %v2324
        %2383 = vmatprep.subr.bf16.mxu0 0
        %2384 = vmatpush1.bf16.msra.mxu0 %v2323
        %2385 = vmatprep.subr.bf16.mxu0 0
        %2386 = vmatpush1.bf16.msra.mxu0 %v2322
        %2387 = vmatprep.subr.bf16.mxu0 0
        %2388 = vmatpush1.bf16.msra.mxu0 %v2321
        %2389 = vmatprep.subr.bf16.mxu0 0
        %2390 = vmatpush1.bf16.msra.mxu0 %v2320
        %2391 = vmatprep.subr.bf16.mxu0 0
        %2392 = vmatpush1.bf16.msra.mxu0 %v2319
        %2393 = vmatprep.subr.bf16.mxu0 0
        %2394 = vmatpush1.bf16.msra.mxu0 %v2318
        %2395 = vmatprep.subr.bf16.mxu0 0
        %2396 = vmatpush1.bf16.msra.mxu0 %v2317
        %2397 = vmatprep.subr.bf16.mxu0 0
        %2398 = vmatpush2.bf16.msra.mxu0 %v2332
        %2399 = vmatprep.subr.bf16.mxu0 0
        %2400 = vmatpush2.bf16.msra.mxu0 %v2331
        %2401 = vmatprep.subr.bf16.mxu0 0
        %2402 = vmatpush2.bf16.msra.mxu0 %v2330
        %2403 = vmatprep.subr.bf16.mxu0 0
        %2404 = vmatpush2.bf16.msra.mxu0 %v2329
        %2405 = vmatprep.subr.bf16.mxu0 0
        %2406 = vmatpush2.bf16.msra.mxu0 %v2328
        %2407 = vmatprep.subr.bf16.mxu0 0
        %2408 = vmatpush2.bf16.msra.mxu0 %v2327
        %2409 = vmatprep.subr.bf16.mxu0 0
        %2410 = vmatpush2.bf16.msra.mxu0 %v2326
        %2411 = vmatprep.subr.bf16.mxu0 0
        %2412 = vmatpush2.bf16.msra.mxu0 %v2325
        %2413 = vmatprep.mubr.bf16.mxu0 %v2055
        %2414 = vmatmul.mubr.bf16.gmra.mxu0 %v2054
        %v2415 = vpop.f32.mrf.mxu0
        %v2416 = vadd.f32 %v2187, %v2415
        %v2417 = vpop.f32.mrf.mxu0
        %v2418 = vpop.f32.mrf.mxu0
        %v2419 = vadd.f32 %v2187, %v2418
        %v2420 = vpop.f32.mrf.mxu0
        %2421 = vmatprep.mubr.bf16.mxu0 %v2059
        %2422 = vmatmul.mubr.bf16.gmra.mxu0 %v2058
        %v2423 = vpop.f32.mrf.mxu0
        %v2424 = vadd.f32 %v2187, %v2423
        %v2425 = vpop.f32.mrf.mxu0
        %v2426 = vpop.f32.mrf.mxu0
        %v2427 = vadd.f32 %v2187, %v2426
        %v2428 = vpop.f32.mrf.mxu0
        %2429 = vmatprep.mubr.bf16.mxu0 %v2063
        %2430 = vmatmul.mubr.bf16.gmra.mxu0 %v2062
        %v2431 = vpop.f32.mrf.mxu0
        %v2432 = vadd.f32 %v2187, %v2431
        %v2433 = vpop.f32.mrf.mxu0
        %v2434 = vpop.f32.mrf.mxu0
        %v2435 = vadd.f32 %v2187, %v2434
        %v2436 = vpop.f32.mrf.mxu0
        %2437 = vmatprep.mubr.bf16.mxu0 %v2067
        %2438 = vmatmul.mubr.bf16.gmra.mxu0 %v2066
        %v2439 = vpop.f32.mrf.mxu0
        %v2440 = vadd.f32 %v2187, %v2439
        %v2441 = vpop.f32.mrf.mxu0
        %v2442 = vpop.f32.mrf.mxu0
        %v2443 = vadd.f32 %v2187, %v2442
        %v2444 = vpop.f32.mrf.mxu0
        %2445 = vmatprep.mubr.bf16.mxu0 %v2071
        %2446 = vmatmul.mubr.bf16.gmra.mxu0 %v2070
        %v2447 = vpop.f32.mrf.mxu0
        %v2448 = vadd.f32 %v2187, %v2447
        %v2449 = vpop.f32.mrf.mxu0
        %v2450 = vpop.f32.mrf.mxu0
        %v2451 = vadd.f32 %v2187, %v2450
        %v2452 = vpop.f32.mrf.mxu0
        %2453 = vmatprep.mubr.bf16.mxu0 %v2075
        %2454 = vmatmul.mubr.bf16.gmra.mxu0 %v2074
        %v2455 = vpop.f32.mrf.mxu0
        %v2456 = vadd.f32 %v2187, %v2455
        %v2457 = vpop.f32.mrf.mxu0
        %v2458 = vpop.f32.mrf.mxu0
        %v2459 = vadd.f32 %v2187, %v2458
        %v2460 = vpop.f32.mrf.mxu0
        %2461 = vmatprep.mubr.bf16.mxu0 %v2079
        %2462 = vmatmul.mubr.bf16.gmra.mxu0 %v2078
        %v2463 = vpop.f32.mrf.mxu0
        %v2464 = vadd.f32 %v2187, %v2463
        %v2465 = vpop.f32.mrf.mxu0
        %v2466 = vpop.f32.mrf.mxu0
        %v2467 = vadd.f32 %v2187, %v2466
        %v2468 = vpop.f32.mrf.mxu0
        %2469 = vmatprep.mubr.bf16.mxu0 %v2083
        %2470 = vmatmul.mubr.bf16.gmra.mxu0 %v2082
        %v2471 = vpop.f32.mrf.mxu0
        %v2472 = vadd.f32 %v2187, %v2471
        %v2473 = vpop.f32.mrf.mxu0
        %v2474 = vpop.f32.mrf.mxu0
        %v2475 = vadd.f32 %v2187, %v2474
        %v2476 = vpop.f32.mrf.mxu0
        %2477 = vmatprep.mubr.bf16.mxu0 %v2087
        %2478 = vmatmul.mubr.bf16.gmra.mxu0 %v2086
        %v2479 = vpop.f32.mrf.mxu0
        %v2480 = vadd.f32 %v2187, %v2479
        %v2481 = vpop.f32.mrf.mxu0
        %v2482 = vpop.f32.mrf.mxu0
        %v2483 = vadd.f32 %v2187, %v2482
        %v2484 = vpop.f32.mrf.mxu0
        %2485 = vmatprep.mubr.bf16.mxu0 %v2091
        %2486 = vmatmul.mubr.bf16.gmra.mxu0 %v2090
        %v2487 = vpop.f32.mrf.mxu0
        %v2488 = vadd.f32 %v2187, %v2487
        %v2489 = vpop.f32.mrf.mxu0
        %v2490 = vpop.f32.mrf.mxu0
        %v2491 = vadd.f32 %v2187, %v2490
        %v2492 = vpop.f32.mrf.mxu0
        %2493 = vmatprep.mubr.bf16.mxu0 %v2095
        %2494 = vmatmul.mubr.bf16.gmra.mxu0 %v2094
        %v2495 = vpop.f32.mrf.mxu0
        %v2496 = vadd.f32 %v2187, %v2495
        %v2497 = vpop.f32.mrf.mxu0
        %v2498 = vpop.f32.mrf.mxu0
        %v2499 = vadd.f32 %v2187, %v2498
        %v2500 = vpop.f32.mrf.mxu0
        %2501 = vmatprep.mubr.bf16.mxu0 %v2099
        %2502 = vmatmul.mubr.bf16.gmra.mxu0 %v2098
        %v2503 = vpop.f32.mrf.mxu0
        %v2504 = vadd.f32 %v2187, %v2503
        %v2505 = vpop.f32.mrf.mxu0
        %v2506 = vpop.f32.mrf.mxu0
        %v2507 = vadd.f32 %v2187, %v2506
        %v2508 = vpop.f32.mrf.mxu0
        %2509 = vmatprep.mubr.bf16.mxu0 %v2103
        %2510 = vmatmul.mubr.bf16.gmra.mxu0 %v2102
        %v2511 = vpop.f32.mrf.mxu0
        %v2512 = vadd.f32 %v2187, %v2511
        %v2513 = vpop.f32.mrf.mxu0
        %v2514 = vpop.f32.mrf.mxu0
        %v2515 = vadd.f32 %v2187, %v2514
        %v2516 = vpop.f32.mrf.mxu0
        %2517 = vmatprep.mubr.bf16.mxu0 %v2107
        %2518 = vmatmul.mubr.bf16.gmra.mxu0 %v2106
        %v2519 = vpop.f32.mrf.mxu0
        %v2520 = vadd.f32 %v2187, %v2519
        %v2521 = vpop.f32.mrf.mxu0
        %v2522 = vpop.f32.mrf.mxu0
        %v2523 = vadd.f32 %v2187, %v2522
        %v2524 = vpop.f32.mrf.mxu0
        %2525 = vmatprep.mubr.bf16.mxu0 %v2111
        %2526 = vmatmul.mubr.bf16.gmra.mxu0 %v2110
        %v2527 = vpop.f32.mrf.mxu0
        %v2528 = vadd.f32 %v2187, %v2527
        %v2529 = vpop.f32.mrf.mxu0
        %v2530 = vpop.f32.mrf.mxu0
        %v2531 = vadd.f32 %v2187, %v2530
        %v2532 = vpop.f32.mrf.mxu0
        %2533 = vmatprep.mubr.bf16.mxu0 %v2115
        %2534 = vmatmul.mubr.bf16.gmra.mxu0 %v2114
        %v2535 = vpop.f32.mrf.mxu0
        %v2536 = vadd.f32 %v2187, %v2535
        %v2537 = vpop.f32.mrf.mxu0
        %v2538 = vpop.f32.mrf.mxu0
        %v2539 = vadd.f32 %v2187, %v2538
        %v2540 = vpop.f32.mrf.mxu0
        %2541 = vdwg.mxu0
        %2542 = vmatprep.subr.bf16.mxu0 0
        %2543 = vmatpush1.bf16.msra.mxu0 %v2340
        %2544 = vmatprep.subr.bf16.mxu0 0
        %2545 = vmatpush1.bf16.msra.mxu0 %v2339
        %2546 = vmatprep.subr.bf16.mxu0 0
        %2547 = vmatpush1.bf16.msra.mxu0 %v2338
        %2548 = vmatprep.subr.bf16.mxu0 0
        %2549 = vmatpush1.bf16.msra.mxu0 %v2337
        %2550 = vmatprep.subr.bf16.mxu0 0
        %2551 = vmatpush1.bf16.msra.mxu0 %v2336
        %2552 = vmatprep.subr.bf16.mxu0 0
        %2553 = vmatpush1.bf16.msra.mxu0 %v2335
        %2554 = vmatprep.subr.bf16.mxu0 0
        %2555 = vmatpush1.bf16.msra.mxu0 %v2334
        %2556 = vmatprep.subr.bf16.mxu0 0
        %2557 = vmatpush1.bf16.msra.mxu0 %v2333
        %2558 = vmatprep.subr.bf16.mxu0 0
        %2559 = vmatpush2.bf16.msra.mxu0 %v2348
        %2560 = vmatprep.subr.bf16.mxu0 0
        %2561 = vmatpush2.bf16.msra.mxu0 %v2347
        %2562 = vmatprep.subr.bf16.mxu0 0
        %2563 = vmatpush2.bf16.msra.mxu0 %v2346
        %2564 = vmatprep.subr.bf16.mxu0 0
        %2565 = vmatpush2.bf16.msra.mxu0 %v2345
        %2566 = vmatprep.subr.bf16.mxu0 0
        %2567 = vmatpush2.bf16.msra.mxu0 %v2344
        %2568 = vmatprep.subr.bf16.mxu0 0
        %2569 = vmatpush2.bf16.msra.mxu0 %v2343
        %2570 = vmatprep.subr.bf16.mxu0 0
        %2571 = vmatpush2.bf16.msra.mxu0 %v2342
        %2572 = vmatprep.subr.bf16.mxu0 0
        %2573 = vmatpush2.bf16.msra.mxu0 %v2341
        %2574 = vmatprep.mubr.bf16.mxu0 %v2057
        %2575 = vmatmul.mubr.bf16.gmra.mxu0 %v2056
        %v2576 = vpop.f32.mrf.mxu0
        %v2577 = vadd.f32 %v2416, %v2576
        %v2578 = vpop.f32.mrf.mxu0
        %v2579 = vpop.f32.mrf.mxu0
        %v2580 = vadd.f32 %v2419, %v2579
        %v2581 = vpop.f32.mrf.mxu0
        %2582 = vmatprep.mubr.bf16.mxu0 %v2061
        %2583 = vmatmul.mubr.bf16.gmra.mxu0 %v2060
        %v2584 = vpop.f32.mrf.mxu0
        %v2585 = vadd.f32 %v2424, %v2584
        %v2586 = vpop.f32.mrf.mxu0
        %v2587 = vpop.f32.mrf.mxu0
        %v2588 = vadd.f32 %v2427, %v2587
        %v2589 = vpop.f32.mrf.mxu0
        %2590 = vmatprep.mubr.bf16.mxu0 %v2065
        %2591 = vmatmul.mubr.bf16.gmra.mxu0 %v2064
        %v2592 = vpop.f32.mrf.mxu0
        %v2593 = vadd.f32 %v2432, %v2592
        %v2594 = vpop.f32.mrf.mxu0
        %v2595 = vpop.f32.mrf.mxu0
        %v2596 = vadd.f32 %v2435, %v2595
        %v2597 = vpop.f32.mrf.mxu0
        %2598 = vmatprep.mubr.bf16.mxu0 %v2069
        %2599 = vmatmul.mubr.bf16.gmra.mxu0 %v2068
        %v2600 = vpop.f32.mrf.mxu0
        %v2601 = vadd.f32 %v2440, %v2600
        %v2602 = vpop.f32.mrf.mxu0
        %v2603 = vpop.f32.mrf.mxu0
        %v2604 = vadd.f32 %v2443, %v2603
        %v2605 = vpop.f32.mrf.mxu0
        %2606 = vmatprep.mubr.bf16.mxu0 %v2073
        %2607 = vmatmul.mubr.bf16.gmra.mxu0 %v2072
        %v2608 = vpop.f32.mrf.mxu0
        %v2609 = vadd.f32 %v2448, %v2608
        %v2610 = vpop.f32.mrf.mxu0
        %v2611 = vpop.f32.mrf.mxu0
        %v2612 = vadd.f32 %v2451, %v2611
        %v2613 = vpop.f32.mrf.mxu0
        %2614 = vmatprep.mubr.bf16.mxu0 %v2077
        %2615 = vmatmul.mubr.bf16.gmra.mxu0 %v2076
        %v2616 = vpop.f32.mrf.mxu0
        %v2617 = vadd.f32 %v2456, %v2616
        %v2618 = vpop.f32.mrf.mxu0
        %v2619 = vpop.f32.mrf.mxu0
        %v2620 = vadd.f32 %v2459, %v2619
        %v2621 = vpop.f32.mrf.mxu0
        %2622 = vmatprep.mubr.bf16.mxu0 %v2081
        %2623 = vmatmul.mubr.bf16.gmra.mxu0 %v2080
        %v2624 = vpop.f32.mrf.mxu0
        %v2625 = vadd.f32 %v2464, %v2624
        %v2626 = vpop.f32.mrf.mxu0
        %v2627 = vpop.f32.mrf.mxu0
        %v2628 = vadd.f32 %v2467, %v2627
        %v2629 = vpop.f32.mrf.mxu0
        %2630 = vmatprep.mubr.bf16.mxu0 %v2085
        %2631 = vmatmul.mubr.bf16.gmra.mxu0 %v2084
        %v2632 = vpop.f32.mrf.mxu0
        %v2633 = vadd.f32 %v2472, %v2632
        %v2634 = vpop.f32.mrf.mxu0
        %v2635 = vpop.f32.mrf.mxu0
        %v2636 = vadd.f32 %v2475, %v2635
        %v2637 = vpop.f32.mrf.mxu0
        %2638 = vmatprep.mubr.bf16.mxu0 %v2089
        %2639 = vmatmul.mubr.bf16.gmra.mxu0 %v2088
        %v2640 = vpop.f32.mrf.mxu0
        %v2641 = vadd.f32 %v2480, %v2640
        %v2642 = vpop.f32.mrf.mxu0
        %v2643 = vpop.f32.mrf.mxu0
        %v2644 = vadd.f32 %v2483, %v2643
        %v2645 = vpop.f32.mrf.mxu0
        %2646 = vmatprep.mubr.bf16.mxu0 %v2093
        %2647 = vmatmul.mubr.bf16.gmra.mxu0 %v2092
        %v2648 = vpop.f32.mrf.mxu0
        %v2649 = vadd.f32 %v2488, %v2648
        %v2650 = vpop.f32.mrf.mxu0
        %v2651 = vpop.f32.mrf.mxu0
        %v2652 = vadd.f32 %v2491, %v2651
        %v2653 = vpop.f32.mrf.mxu0
        %2654 = vmatprep.mubr.bf16.mxu0 %v2097
        %2655 = vmatmul.mubr.bf16.gmra.mxu0 %v2096
        %v2656 = vpop.f32.mrf.mxu0
        %v2657 = vadd.f32 %v2496, %v2656
        %v2658 = vpop.f32.mrf.mxu0
        %v2659 = vpop.f32.mrf.mxu0
        %v2660 = vadd.f32 %v2499, %v2659
        %v2661 = vpop.f32.mrf.mxu0
        %2662 = vmatprep.mubr.bf16.mxu0 %v2101
        %2663 = vmatmul.mubr.bf16.gmra.mxu0 %v2100
        %v2664 = vpop.f32.mrf.mxu0
        %v2665 = vadd.f32 %v2504, %v2664
        %v2666 = vpop.f32.mrf.mxu0
        %v2667 = vpop.f32.mrf.mxu0
        %v2668 = vadd.f32 %v2507, %v2667
        %v2669 = vpop.f32.mrf.mxu0
        %2670 = vmatprep.mubr.bf16.mxu0 %v2105
        %2671 = vmatmul.mubr.bf16.gmra.mxu0 %v2104
        %v2672 = vpop.f32.mrf.mxu0
        %v2673 = vadd.f32 %v2512, %v2672
        %v2674 = vpop.f32.mrf.mxu0
        %v2675 = vpop.f32.mrf.mxu0
        %v2676 = vadd.f32 %v2515, %v2675
        %v2677 = vpop.f32.mrf.mxu0
        %2678 = vmatprep.mubr.bf16.mxu0 %v2109
        %2679 = vmatmul.mubr.bf16.gmra.mxu0 %v2108
        %v2680 = vpop.f32.mrf.mxu0
        %v2681 = vadd.f32 %v2520, %v2680
        %v2682 = vpop.f32.mrf.mxu0
        %v2683 = vpop.f32.mrf.mxu0
        %v2684 = vadd.f32 %v2523, %v2683
        %v2685 = vpop.f32.mrf.mxu0
        %2686 = vmatprep.mubr.bf16.mxu0 %v2113
        %2687 = vmatmul.mubr.bf16.gmra.mxu0 %v2112
        %v2688 = vpop.f32.mrf.mxu0
        %v2689 = vadd.f32 %v2528, %v2688
        %v2690 = vpop.f32.mrf.mxu0
        %v2691 = vpop.f32.mrf.mxu0
        %v2692 = vadd.f32 %v2531, %v2691
        %v2693 = vpop.f32.mrf.mxu0
        %2694 = vmatprep.mubr.bf16.mxu0 %v2117
        %2695 = vmatmul.mubr.bf16.gmra.mxu0 %v2116
        %v2696 = vpop.f32.mrf.mxu0
        %v2697 = vadd.f32 %v2536, %v2696
        %v2698 = vpop.f32.mrf.mxu0
        %v2699 = vpop.f32.mrf.mxu0
        %v2700 = vadd.f32 %v2539, %v2699
        %v2701 = vpop.f32.mrf.mxu0
        %2702 = vdwg.mxu0
        %2703 = vst [vmem:[%s452] sm:$0xff] %v2577
        %2704 = vst [vmem:[%s452 + $0x8] sm:$0xff] %v2580
        %2705 = vst [vmem:[%s452 + $0x10] sm:$0xff] %v2585
        %2706 = vst [vmem:[%s452 + $0x18] sm:$0xff] %v2588
        %2707 = vst [vmem:[%s452 + $0x20] sm:$0xff] %v2593
        %2708 = vst [vmem:[%s452 + $0x28] sm:$0xff] %v2596
        %2709 = vst [vmem:[%s452 + $0x30] sm:$0xff] %v2601
        %2710 = vst [vmem:[%s452 + $0x38] sm:$0xff] %v2604
        %2711 = vst [vmem:[%s452 + $0x40] sm:$0xff] %v2609
        %2712 = vst [vmem:[%s452 + $0x48] sm:$0xff] %v2612
        %2713 = vst [vmem:[%s452 + $0x50] sm:$0xff] %v2617
        %2714 = vst [vmem:[%s452 + $0x58] sm:$0xff] %v2620
        %2715 = vst [vmem:[%s452 + $0x60] sm:$0xff] %v2625
        %2716 = vst [vmem:[%s452 + $0x68] sm:$0xff] %v2628
        %2717 = vst [vmem:[%s452 + $0x70] sm:$0xff] %v2633
        %2718 = vst [vmem:[%s452 + $0x78] sm:$0xff] %v2636
        %2719 = vst [vmem:[%s452 + $0x80] sm:$0xff] %v2641
        %2720 = vst [vmem:[%s452 + $0x88] sm:$0xff] %v2644
        %2721 = vst [vmem:[%s452 + $0x90] sm:$0xff] %v2649
        %2722 = vst [vmem:[%s452 + $0x98] sm:$0xff] %v2652
        %2723 = vst [vmem:[%s452 + $0xa0] sm:$0xff] %v2657
        %2724 = vst [vmem:[%s452 + $0xa8] sm:$0xff] %v2660
        %2725 = vst [vmem:[%s452 + $0xb0] sm:$0xff] %v2665
        %2726 = vst [vmem:[%s452 + $0xb8] sm:$0xff] %v2668
        %2727 = vst [vmem:[%s452 + $0xc0] sm:$0xff] %v2673
        %2728 = vst [vmem:[%s452 + $0xc8] sm:$0xff] %v2676
        %2729 = vst [vmem:[%s452 + $0xd0] sm:$0xff] %v2681
        %2730 = vst [vmem:[%s452 + $0xd8] sm:$0xff] %v2684
        %2731 = vst [vmem:[%s452 + $0xe0] sm:$0xff] %v2689
        %2732 = vst [vmem:[%s452 + $0xe8] sm:$0xff] %v2692
        %2733 = vst [vmem:[%s452 + $0xf0] sm:$0xff] %v2697
        %2734 = vst [vmem:[%s452 + $0xf8] sm:$0xff] %v2700
        %s2735 = sand.u32 %s228, 1
        %s2736 = scalar_lea.sflag [#allocation6], %s2735
        %s2737 = sand.u32 %s228, 1
        %s2738 = smul.addr %s2737, 256
        %s2739 = scalar_lea.vmem [#allocation15], %s2738
        // Predicated region
        $region77: #{tpu_custom_call.1} parent=51 // pred_check
          %p2740 = pneg %p238
        $region78: #{tpu_custom_call.1} parent=51 // pred_check_branch
          %2742 = sbr.rel (%p2740) target = $region80
        $region79: #{tpu_custom_call.1} parent=51 // pred_region
          %s2743 = smul.u32 32, %s35
          %s2745 = ssub.s32 4096, 4096
          %2746 = vsyncadd %s2736, %s2745
          %s2747 = smul.addr %s2743, 128
          %s2748 = scalar_lea.hbm %s9, %s2747
          %s2749 = sshll.u32 %s2739, 4
          %s2750 = int_to_ptr.vmem [resolvable:$true] %s2749
          %2755 = dma.vmem_to_hbm [thread:$0]  %s2750, 4096, %s2748, %s2736, 128, 128, 8
        $region80: #{tpu_custom_call.1} parent=51 // pred_fallthru
          _
      $region52: #{tpu_custom_call.1} parent=5 // pred_fallthru
        _
      %p2756 = scmp.le.s32.totalorder 2, %s30
      // Predicated region
      $region81: #{tpu_custom_call.1} parent=5 // pred_check
        %p2757 = pneg %p2756
      $region82: #{tpu_custom_call.1} parent=5 // pred_check_branch
        %2759 = sbr.rel (%p2757) target = $region84
      $region83: #{tpu_custom_call.1} parent=5 // pred_region
        %s2760 = ssub.s32 %s30, 2
        // Predicated region
        $region85: #{tpu_custom_call.1} parent=83 // pred_check
          %p2761 = pneg %p244
        $region86: #{tpu_custom_call.1} parent=83 // pred_check_branch
          %2763 = sbr.rel (%p2761) target = $region88
        $region87: #{tpu_custom_call.1} parent=83 // pred_region
          %s2764 = sand.u32 %s229, 1
          %s2765 = scalar_lea.sflag [#allocation6], %s2764
          %s2766 = sand.u32 %s229, 1
          %s2767 = smul.addr %s2766, 256
          %s2768 = scalar_lea.vmem [#allocation15], %s2767
          %2769 = dma.done %s2765, 4096
        $region88: #{tpu_custom_call.1} parent=83 // pred_fallthru
          _
      $region84: #{tpu_custom_call.1} parent=5 // pred_fallthru
        _
    $region6: #{tpu_custom_call.1} parent=1 // loop_footer
      %s34 = sadd.s32 1, %s30
    $region7: #{tpu_custom_call.1} parent=1 // loop_footer_branch
      %29 = sbr.rel target = $region3
    $region8: #{tpu_custom_call.1} parent=1 // loop_exit
      _
    %2770 = vsyncpa [#allocation5], 1
    %s2771 = scalar_lea.sflag [#allocation5], 1
    %2772 = vsyncpa %s2771, 1
    %2773 = vsyncpa [#allocation8], 1
    %s2774 = scalar_lea.sflag [#allocation8], 1
    %2775 = vsyncpa %s2774, 1
    %2776 = vsyncpa [#allocation11], 1
    %2777 = vsyncpa [#allocation14], 1
    %2778 = vsyncpa [#allocation6], 1
    %s2779 = scalar_lea.sflag [#allocation6], 1
    %2780 = vsyncpa %s2779, 1

</llo_original>
